<compile_context>
chip_gen: v7x
topology: tpu7x:2x2x1
jax: 0.10.0
libtpu: 0.0.40
codegen_flags: <defaults>
</compile_context>

<pallas_src>
import math

import jax
import jax.numpy as jnp
from jax import lax
from jax.experimental import pallas as pl
from jax.experimental.pallas import tpu as pltpu


def _bigru_mean_kernel(
    x_ref,       # (T, Bb, D)   time-major input block
    wih_ref,     # (D, 6H)      [W_ih_f^T | W_ih_b^T]
    whhf_ref,    # (H, 3H)      W_hh_f^T
    whhb_ref,    # (H, 3H)      W_hh_b^T
    bfold_ref,   # (1, 6H)      b_ih (all gates) + b_hh (r,z) for both dirs
    bhn_ref,     # (1, 2H)      [b_hh_n_f | b_hh_n_b]
    out_ref,     # (Bb, 2H)     time-mean of concat(fwd, bwd) hidden states
    gi_ref,      # scratch (T, Bb, 6H) gate pre-activations, both directions
):
    T, Bb, D = x_ref.shape
    H = whhf_ref.shape[0]
    G = 3 * H
    mm_dtype = whhf_ref.dtype          # f32 (default) or bf16 (use_bf16)

    # --- One wide MXU projection for BOTH directions, single full-width store.
    x_flat = x_ref[...].reshape(T * Bb, D)
    gi_all = jnp.dot(x_flat, wih_ref[...], preferred_element_type=jnp.float32)
    gi_all = gi_all + bfold_ref[...]                 # biases folded once, off-loop
    gi_ref[...] = gi_all.reshape(T, Bb, 2 * G).astype(gi_ref.dtype)

    w_hh_f = whhf_ref[...]
    w_hh_b = whhb_ref[...]
    # Hoisted (1,H)->(Bb,H) broadcasts: traced once, NOT re-emitted per step.
    bhn_f = jnp.broadcast_to(bhn_ref[:, :H], (Bb, H)).astype(jnp.float32)
    bhn_b = jnp.broadcast_to(bhn_ref[:, H:], (Bb, H)).astype(jnp.float32)

    h0 = jnp.zeros((Bb, H), jnp.float32)
    acc0 = jnp.zeros((Bb, H), jnp.float32)

    # --- Serial recurrence: two independent per-direction chains per step.
    def body(i, carry):
        h_f, h_b, acc_f, acc_b = carry
        gi_f = gi_ref[i][:, :G].astype(jnp.float32)          # fwd gates @ t = i
        gi_b = gi_ref[T - 1 - i][:, G:].astype(jnp.float32)  # bwd gates @ t = T-1-i

        gh_f = jnp.dot(h_f.astype(mm_dtype), w_hh_f,
                       preferred_element_type=jnp.float32)    # (Bb, 3H)
        gh_b = jnp.dot(h_b.astype(mm_dtype), w_hh_b,
                       preferred_element_type=jnp.float32)    # (Bb, 3H)

        # forward direction (b_ih + b_hh_{r,z} already folded; b_hh_n exact)
        r_f = jax.nn.sigmoid(gi_f[:, :H] + gh_f[:, :H])
        z_f = jax.nn.sigmoid(gi_f[:, H:2 * H] + gh_f[:, H:2 * H])
        n_f = jnp.tanh(gi_f[:, 2 * H:] + r_f * (gh_f[:, 2 * H:] + bhn_f))
        h_f_new = (1.0 - z_f) * n_f + z_f * h_f

        # backward direction
        r_b = jax.nn.sigmoid(gi_b[:, :H] + gh_b[:, :H])
        z_b = jax.nn.sigmoid(gi_b[:, H:2 * H] + gh_b[:, H:2 * H])
        n_b = jnp.tanh(gi_b[:, 2 * H:] + r_b * (gh_b[:, 2 * H:] + bhn_b))
        h_b_new = (1.0 - z_b) * n_b + z_b * h_b

        return h_f_new, h_b_new, acc_f + h_f_new, acc_b + h_b_new

    unroll = True if T <= 32 else 4
    _, _, acc_f, acc_b = lax.fori_loop(0, T, body, (h0, h0, acc0, acc0),
                                       unroll=unroll)

    # Single end-of-block concat; no per-step [h_f | h_b] lane shuffle.
    # TODO(synk): if production H stays < 128, restructure for lane density
    # (pad gate widths to 128 lanes or put batch on the lane axis).
    out_ref[...] = (jnp.concatenate([acc_f, acc_b], axis=-1)
                    * jnp.float32(1.0 / T)).astype(out_ref.dtype)


def _vmem_capacity_bytes():
    try:
        cap = getattr(pltpu.get_tpu_info(), "vmem_capacity_bytes", None)
        if cap:
            return int(cap)
    except Exception:
        pass
    return 64 << 20  # conservative: v7x per-TensorCore physical VMEM


def _pick_batch_block(B, T, D, H, budget_bytes, mm_itemsize):
    """Pick a batch block that (a) is legal for (8,128) tiling, (b) fits the
    VMEM budget, and (c) yields a grid of >= 2 steps when B >= 16 so that
    v7x's two TensorCores both get work under dimension_semantics=parallel."""
    def need_bytes(bb):
        return (2 * T * bb * D * mm_itemsize          # x block (double-buffered)
                + D * 6 * H * mm_itemsize             # w_ih (constant map -> resident)
                + 2 * H * 3 * H * mm_itemsize         # w_hh fwd + bwd
                + 8 * H * 4                           # biases
                + 2 * bb * 2 * H * 4                  # out block (double-buffered)
                + T * bb * 6 * H * mm_itemsize)       # gi scratch (single-buffered)

    cands = [c for c in range(1, B + 1)
             if B % c == 0 and (c % 8 == 0 or c == B)]
    cands.sort(reverse=True)
    preferred = [c for c in cands if B // c >= 2] if B >= 16 else list(cands)
    for c in preferred + cands:
        if need_bytes(c) <= budget_bytes:
            return c, need_bytes(c)
    # TODO(synk): for very large T, chunk the input projection over T (keep the
    # gi slab in HBM via memory_space=pl.ANY + double-buffered DMA) instead of
    # relying on batch-block shrinking alone.
    c = cands[-1]
    return c, need_bytes(c)


def rnn_encoder_forward(x, params, input_dim, hidden_size, use_bf16=False):
    """Mirrors RNNEncoder.forward: reshape -> bidirectional GRU -> mean over time."""
    B = x.shape[0]
    x = x.reshape(B, -1, input_dim).astype(jnp.float32)          # (B, T, D)
    T = x.shape[1]
    D = input_dim
    H = hidden_size // 2

    wih_f, whh_f, bih_f, bhh_f, wih_b, whh_b, bih_b, bhh_b = params
    mm_dtype = jnp.bfloat16 if use_bf16 else jnp.float32
    mm_itemsize = jnp.dtype(mm_dtype).itemsize

    # Packed weights: one wide input projection; per-direction recurrence weights
    # (no zero-padded block-diagonal -> no wasted MXU passes / DMA at any H).
    w_ih = jnp.concatenate([wih_f.T, wih_b.T], axis=1).astype(mm_dtype)   # (D, 6H)
    whh_f_t = whh_f.T.astype(mm_dtype)                                    # (H, 3H)
    whh_b_t = whh_b.T.astype(mm_dtype)                                    # (H, 3H)

    zeros_h = jnp.zeros((H,), jnp.float32)
    fold_f = bih_f + jnp.concatenate([bhh_f[:2 * H], zeros_h])  # b_hh only for r,z
    fold_b = bih_b + jnp.concatenate([bhh_b[:2 * H], zeros_h])
    b_fold = jnp.concatenate([fold_f, fold_b]).reshape(1, 6 * H).astype(jnp.float32)
    b_hn = jnp.concatenate([bhh_f[2 * H:], bhh_b[2 * H:]]).reshape(1, 2 * H)
    b_hn = b_hn.astype(jnp.float32)

    # Time-major layout so the in-loop gate loads are cheap first-axis ref[i].
    # TODO(synk): replace this wrapper-side transpose (one extra HBM pass on x)
    # with strided pl.ds(i, Bb, stride=T) loads from a batch-major gi scratch
    # once that path is validated on all target generations.
    x_tm = jnp.transpose(x, (1, 0, 2)).astype(mm_dtype)          # (T, B, D)

    # VMEM budgeting: ~80% of physical capacity (queried), tightened estimate.
    budget = int(0.80 * _vmem_capacity_bytes())
    b_blk, need = _pick_batch_block(B, T, D, H, budget, mm_itemsize)
    grid = (B // b_blk,)
    vmem_limit = int(min(max(need + (4 << 20), 16 << 20), budget))

    gi_dtype = mm_dtype

    out = pl.pallas_call(
        _bigru_mean_kernel,
        out_shape=jax.ShapeDtypeStruct((B, hidden_size), jnp.float32),
        grid=grid,
        in_specs=[
            pl.BlockSpec((T, b_blk, D), lambda b: (0, b, 0)),
            pl.BlockSpec((D, 6 * H), lambda b: (0, 0)),
            pl.BlockSpec((H, 3 * H), lambda b: (0, 0)),
            pl.BlockSpec((H, 3 * H), lambda b: (0, 0)),
            pl.BlockSpec((1, 6 * H), lambda b: (0, 0)),
            pl.BlockSpec((1, 2 * H), lambda b: (0, 0)),
        ],
        out_specs=pl.BlockSpec((b_blk, hidden_size), lambda b: (b, 0)),
        scratch_shapes=[pltpu.VMEM((T, b_blk, 6 * H), gi_dtype)],
        compiler_params=pltpu.CompilerParams(
            dimension_semantics=("parallel",),
            vmem_limit_bytes=vmem_limit,
        ),
    )(x_tm, w_ih, whh_f_t, whh_b_t, b_fold, b_hn)
    return out


def rnn_encoder_reference(x, params, input_dim, hidden_size):
    """Pure-JAX reference of the same forward pass (for verification)."""
    B = x.shape[0]
    x = x.reshape(B, -1, input_dim).astype(jnp.float32)          # (B, T, D)
    H = hidden_size // 2
    wih_f, whh_f, bih_f, bhh_f, wih_b, whh_b, bih_b, bhh_b = params

    def run_dir(xs_btd, wih, whh, bih, bhh):
        def step(h, x_t):
            gi = x_t @ wih.T + bih
            gh = h @ whh.T + bhh
            r = jax.nn.sigmoid(gi[:, :H] + gh[:, :H])
            z = jax.nn.sigmoid(gi[:, H:2 * H] + gh[:, H:2 * H])
            n = jnp.tanh(gi[:, 2 * H:] + r * gh[:, 2 * H:])
            h_new = (1.0 - z) * n + z * h
            return h_new, h_new
        h0 = jnp.zeros((B, H), jnp.float32)
        _, hs = lax.scan(step, h0, jnp.transpose(xs_btd, (1, 0, 2)))
        return hs                                                # (T, B, H)

    hs_f = run_dir(x, wih_f, whh_f, bih_f, bhh_f)
    hs_b = run_dir(x[:, ::-1, :], wih_b, whh_b, bih_b, bhh_b)[::-1]
    outputs = jnp.concatenate([hs_f, hs_b], axis=-1)             # (T, B, 2H)
    return jnp.mean(outputs, axis=0)                             # (B, 2H)


if __name__ == "__main__":
    # Shapes consistent with the module: input_dim=4, hidden_size=32 (H=16 per
    # direction). x: (B, T*D) = (2, 32) -> reshaped to (B, T, D) = (2, 8, 4).
    input_dim, hidden_size, latent_size = 4, 32, 8   # latent_size unused in forward
    B, T = 2, 8
    H = hidden_size // 2

    key = jax.random.PRNGKey(0)
    keys = jax.random.split(key, 9)
    bound = 1.0 / math.sqrt(H)   # PyTorch GRU default init: U(-1/sqrt(H), 1/sqrt(H))

    def u(k, shape):
        return jax.random.uniform(k, shape, jnp.float32, minval=-bound, maxval=bound)

    params = (
        u(keys[0], (3 * H, input_dim)),   # weight_ih_l0         (forward)
        u(keys[1], (3 * H, H)),           # weight_hh_l0
        u(keys[2], (3 * H,)),             # bias_ih_l0
        u(keys[3], (3 * H,)),             # bias_hh_l0
        u(keys[4], (3 * H, input_dim)),   # weight_ih_l0_reverse (backward)
        u(keys[5], (3 * H, H)),           # weight_hh_l0_reverse
        u(keys[6], (3 * H,)),             # bias_ih_l0_reverse
        u(keys[7], (3 * H,)),             # bias_hh_l0_reverse
    )

    x = jax.random.normal(keys[8], (B, T * input_dim), jnp.float32)

    out = rnn_encoder_forward(x, params, input_dim, hidden_size)
    out = jax.block_until_ready(out)

    ref = jax.block_until_ready(
        rnn_encoder_reference(x, params, input_dim, hidden_size))

    assert out.shape == (B, hidden_size), out.shape
    assert jnp.allclose(out, ref, atol=1e-5, rtol=1e-5), (
        f"max abs err {jnp.max(jnp.abs(out - ref))}")
    print("KERNEL_OK")
</pallas_src>

<mosaic_0001>
module attributes {stable_mosaic.version = 11 : i64} {
  func.func @_bigru_mean_kernel(%arg0: i32, %arg1: memref<8x2x4xf32, #tpu.memory_space<vmem>>, %arg2: memref<4x96xf32, #tpu.memory_space<vmem>>, %arg3: memref<16x48xf32, #tpu.memory_space<vmem>>, %arg4: memref<16x48xf32, #tpu.memory_space<vmem>>, %arg5: memref<1x96xf32, #tpu.memory_space<vmem>>, %arg6: memref<1x32xf32, #tpu.memory_space<vmem>>, %arg7: memref<2x32xf32, #tpu.memory_space<vmem>>, %arg8: memref<8x2x96xf32, #tpu.memory_space<vmem>>) attributes {dimension_semantics = [#tpu.dimension_semantics<parallel>], iteration_bounds = array<i64: 1>, scalar_prefetch = 0 : i64, scratch_operands = 1 : i64, tpu.core_type = #tpu.core_type<tc>, window_params = [{transform_indices = @transform_0, window_bounds = array<i64: 8, 2, 4>}, {pipeline_mode = #tpu.pipeline_mode<synchronous>, transform_indices = @transform_1, window_bounds = array<i64: 4, 96>}, {pipeline_mode = #tpu.pipeline_mode<synchronous>, transform_indices = @transform_2, window_bounds = array<i64: 16, 48>}, {pipeline_mode = #tpu.pipeline_mode<synchronous>, transform_indices = @transform_3, window_bounds = array<i64: 16, 48>}, {pipeline_mode = #tpu.pipeline_mode<synchronous>, transform_indices = @transform_4, window_bounds = array<i64: 1, 96>}, {pipeline_mode = #tpu.pipeline_mode<synchronous>, transform_indices = @transform_5, window_bounds = array<i64: 1, 32>}, {transform_indices = @transform_6, window_bounds = array<i64: 2, 32>}]} {
    %c0 = arith.constant 0 : index
    %c0_0 = arith.constant 0 : index
    %c0_1 = arith.constant 0 : index
    %0 = vector.load %arg1[%c0, %c0_0, %c0_1] : memref<8x2x4xf32, #tpu.memory_space<vmem>>, vector<8x2x4xf32>
    %1 = vector.shape_cast %0 : vector<8x2x4xf32> to vector<16x4xf32>
    %c0_2 = arith.constant 0 : index
    %c0_3 = arith.constant 0 : index
    %2 = vector.load %arg2[%c0_2, %c0_3] : memref<4x96xf32, #tpu.memory_space<vmem>>, vector<4x96xf32>
    %cst = arith.constant dense<0.000000e+00> : vector<16x96xf32>
    %3 = tpu.matmul %1, %2, %cst {dimension_numbers = #tpu.dot_dimension_numbers<[1], [0], [0], [1], [0, 0, 1, 1], [], []>} : vector<16x4xf32>, vector<4x96xf32>, vector<16x96xf32> -> vector<16x96xf32>
    %c0_4 = arith.constant 0 : index
    %c0_5 = arith.constant 0 : index
    %4 = vector.load %arg5[%c0_4, %c0_5] : memref<1x96xf32, #tpu.memory_space<vmem>>, vector<1x96xf32>
    %5 = vector.broadcast %4 : vector<1x96xf32> to vector<16x96xf32>
    %6 = arith.addf %3, %5 : vector<16x96xf32>
    %7 = vector.shape_cast %6 : vector<16x96xf32> to vector<8x2x96xf32>
    %c0_6 = arith.constant 0 : index
    %c0_7 = arith.constant 0 : index
    %c0_8 = arith.constant 0 : index
    %8 = vector.load %arg8[%c0_6, %c0_7, %c0_8] : memref<8x2x96xf32, #tpu.memory_space<vmem>>, vector<8x2x96xf32>
    tpu.vector_store %arg8[%c0_6, %c0_7, %c0_8], %7 {strides = array<i32>} : memref<8x2x96xf32, #tpu.memory_space<vmem>>, vector<8x2x96xf32>,
    %c0_9 = arith.constant 0 : index
    %c0_10 = arith.constant 0 : index
    %9 = vector.load %arg3[%c0_9, %c0_10] : memref<16x48xf32, #tpu.memory_space<vmem>>, vector<16x48xf32>
    %c0_11 = arith.constant 0 : index
    %c0_12 = arith.constant 0 : index
    %10 = vector.load %arg4[%c0_11, %c0_12] : memref<16x48xf32, #tpu.memory_space<vmem>>, vector<16x48xf32>
    %c0_13 = arith.constant 0 : index
    %c0_14 = arith.constant 0 : index
    %11 = vector.load %arg6[%c0_13, %c0_14] : memref<1x32xf32, #tpu.memory_space<vmem>>, vector<1x16xf32>
    %12 = vector.shape_cast %11 : vector<1x16xf32> to vector<1x16xf32>
    %13 = vector.broadcast %12 : vector<1x16xf32> to vector<2x16xf32>
    %c0_15 = arith.constant 0 : index
    %c16 = arith.constant 16 : index
    %14 = vector.load %arg6[%c0_15, %c16] : memref<1x32xf32, #tpu.memory_space<vmem>>, vector<1x16xf32>
    %15 = vector.shape_cast %14 : vector<1x16xf32> to vector<1x16xf32>
    %16 = vector.broadcast %15 : vector<1x16xf32> to vector<2x16xf32>
    %cst_16 = arith.constant 0.000000e+00 : f32
    %17 = vector.broadcast %cst_16 : f32 to vector<2x16xf32>
    %cst_17 = arith.constant 0.000000e+00 : f32
    %18 = vector.broadcast %cst_17 : f32 to vector<2x16xf32>
    %c0_i32 = arith.constant 0 : i32
    %19 = arith.index_cast %c0_i32 : i32 to index
    %c0_18 = arith.constant 0 : index
    %c0_19 = arith.constant 0 : index
    %20 = vector.load %arg8[%19, %c0_18, %c0_19] : memref<8x2x96xf32, #tpu.memory_space<vmem>>, vector<1x2x96xf32>
    %21 = vector.shape_cast %20 : vector<1x2x96xf32> to vector<2x96xf32>
    %22 = vector.extract_strided_slice %21 {offsets = [0, 0], sizes = [2, 48], strides = [1, 1]} : vector<2x96xf32> to vector<2x48xf32>
    %c7_i32 = arith.constant 7 : i32
    %23 = arith.subi %c7_i32, %c0_i32 : i32
    %24 = arith.index_cast %23 : i32 to index
    %c0_20 = arith.constant 0 : index
    %c0_21 = arith.constant 0 : index
    %25 = vector.load %arg8[%24, %c0_20, %c0_21] : memref<8x2x96xf32, #tpu.memory_space<vmem>>, vector<1x2x96xf32>
    %26 = vector.shape_cast %25 : vector<1x2x96xf32> to vector<2x96xf32>
    %27 = vector.extract_strided_slice %26 {offsets = [0, 48], sizes = [2, 48], strides = [1, 1]} : vector<2x96xf32> to vector<2x48xf32>
    %cst_22 = arith.constant dense<0.000000e+00> : vector<2x48xf32>
    %28 = tpu.matmul %17, %9, %cst_22 {dimension_numbers = #tpu.dot_dimension_numbers<[1], [0], [0], [1], [0, 0, 1, 1], [], []>} : vector<2x16xf32>, vector<16x48xf32>, vector<2x48xf32> -> vector<2x48xf32>
    %cst_23 = arith.constant dense<0.000000e+00> : vector<2x48xf32>
    %29 = tpu.matmul %17, %10, %cst_23 {dimension_numbers = #tpu.dot_dimension_numbers<[1], [0], [0], [1], [0, 0, 1, 1], [], []>} : vector<2x16xf32>, vector<16x48xf32>, vector<2x48xf32> -> vector<2x48xf32>
    %30 = vector.extract_strided_slice %22 {offsets = [0, 0], sizes = [2, 16], strides = [1, 1]} : vector<2x48xf32> to vector<2x16xf32>
    %31 = vector.extract_strided_slice %28 {offsets = [0, 0], sizes = [2, 16], strides = [1, 1]} : vector<2x48xf32> to vector<2x16xf32>
    %32 = arith.addf %30, %31 : vector<2x16xf32>
    %33 = arith.negf %32 : vector<2x16xf32>
    %34 = math.exp %33 : vector<2x16xf32>
    %cst_24 = arith.constant 1.000000e+00 : f32
    %35 = vector.broadcast %cst_24 : f32 to vector<2x16xf32>
    %36 = arith.addf %35, %34 : vector<2x16xf32>
    %37 = arith.divf %35, %36 : vector<2x16xf32>
    %38 = vector.extract_strided_slice %22 {offsets = [0, 16], sizes = [2, 16], strides = [1, 1]} : vector<2x48xf32> to vector<2x16xf32>
    %39 = vector.extract_strided_slice %28 {offsets = [0, 16], sizes = [2, 16], strides = [1, 1]} : vector<2x48xf32> to vector<2x16xf32>
    %40 = arith.addf %38, %39 : vector<2x16xf32>
    %41 = arith.negf %40 : vector<2x16xf32>
    %42 = math.exp %41 : vector<2x16xf32>
    %cst_25 = arith.constant 1.000000e+00 : f32
    %43 = vector.broadcast %cst_25 : f32 to vector<2x16xf32>
    %44 = arith.addf %43, %42 : vector<2x16xf32>
    %45 = arith.divf %43, %44 : vector<2x16xf32>
    %46 = vector.extract_strided_slice %22 {offsets = [0, 32], sizes = [2, 16], strides = [1, 1]} : vector<2x48xf32> to vector<2x16xf32>
    %47 = vector.extract_strided_slice %28 {offsets = [0, 32], sizes = [2, 16], strides = [1, 1]} : vector<2x48xf32> to vector<2x16xf32>
    %48 = arith.addf %47, %13 : vector<2x16xf32>
    %49 = arith.mulf %37, %48 : vector<2x16xf32>
    %50 = arith.addf %46, %49 : vector<2x16xf32>
    %51 = math.tanh %50 : vector<2x16xf32>
    %cst_26 = arith.constant 1.000000e+00 : f32
    %52 = vector.broadcast %cst_26 : f32 to vector<2x16xf32>
    %53 = arith.subf %52, %45 : vector<2x16xf32>
    %54 = arith.mulf %53, %51 : vector<2x16xf32>
    %55 = arith.mulf %45, %17 : vector<2x16xf32>
    %56 = arith.addf %54, %55 : vector<2x16xf32>
    %57 = vector.extract_strided_slice %27 {offsets = [0, 0], sizes = [2, 16], strides = [1, 1]} : vector<2x48xf32> to vector<2x16xf32>
    %58 = vector.extract_strided_slice %29 {offsets = [0, 0], sizes = [2, 16], strides = [1, 1]} : vector<2x48xf32> to vector<2x16xf32>
    %59 = arith.addf %57, %58 : vector<2x16xf32>
    %60 = arith.negf %59 : vector<2x16xf32>
    %61 = math.exp %60 : vector<2x16xf32>
    %cst_27 = arith.constant 1.000000e+00 : f32
    %62 = vector.broadcast %cst_27 : f32 to vector<2x16xf32>
    %63 = arith.addf %62, %61 : vector<2x16xf32>
    %64 = arith.divf %62, %63 : vector<2x16xf32>
    %65 = vector.extract_strided_slice %27 {offsets = [0, 16], sizes = [2, 16], strides = [1, 1]} : vector<2x48xf32> to vector<2x16xf32>
    %66 = vector.extract_strided_slice %29 {offsets = [0, 16], sizes = [2, 16], strides = [1, 1]} : vector<2x48xf32> to vector<2x16xf32>
    %67 = arith.addf %65, %66 : vector<2x16xf32>
    %68 = arith.negf %67 : vector<2x16xf32>
    %69 = math.exp %68 : vector<2x16xf32>
    %cst_28 = arith.constant 1.000000e+00 : f32
    %70 = vector.broadcast %cst_28 : f32 to vector<2x16xf32>
    %71 = arith.addf %70, %69 : vector<2x16xf32>
    %72 = arith.divf %70, %71 : vector<2x16xf32>
    %73 = vector.extract_strided_slice %27 {offsets = [0, 32], sizes = [2, 16], strides = [1, 1]} : vector<2x48xf32> to vector<2x16xf32>
    %74 = vector.extract_strided_slice %29 {offsets = [0, 32], sizes = [2, 16], strides = [1, 1]} : vector<2x48xf32> to vector<2x16xf32>
    %75 = arith.addf %74, %16 : vector<2x16xf32>
    %76 = arith.mulf %64, %75 : vector<2x16xf32>
    %77 = arith.addf %73, %76 : vector<2x16xf32>
    %78 = math.tanh %77 : vector<2x16xf32>
    %cst_29 = arith.constant 1.000000e+00 : f32
    %79 = vector.broadcast %cst_29 : f32 to vector<2x16xf32>
    %80 = arith.subf %79, %72 : vector<2x16xf32>
    %81 = arith.mulf %80, %78 : vector<2x16xf32>
    %82 = arith.mulf %72, %17 : vector<2x16xf32>
    %83 = arith.addf %81, %82 : vector<2x16xf32>
    %84 = arith.addf %18, %56 : vector<2x16xf32>
    %85 = arith.addf %18, %83 : vector<2x16xf32>
    %c1_i32 = arith.constant 1 : i32
    %86 = arith.index_cast %c1_i32 : i32 to index
    %c0_30 = arith.constant 0 : index
    %c0_31 = arith.constant 0 : index
    %87 = vector.load %arg8[%86, %c0_30, %c0_31] : memref<8x2x96xf32, #tpu.memory_space<vmem>>, vector<1x2x96xf32>
    %88 = vector.shape_cast %87 : vector<1x2x96xf32> to vector<2x96xf32>
    %89 = vector.extract_strided_slice %88 {offsets = [0, 0], sizes = [2, 48], strides = [1, 1]} : vector<2x96xf32> to vector<2x48xf32>
    %c7_i32_32 = arith.constant 7 : i32
    %90 = arith.subi %c7_i32_32, %c1_i32 : i32
    %91 = arith.index_cast %90 : i32 to index
    %c0_33 = arith.constant 0 : index
    %c0_34 = arith.constant 0 : index
    %92 = vector.load %arg8[%91, %c0_33, %c0_34] : memref<8x2x96xf32, #tpu.memory_space<vmem>>, vector<1x2x96xf32>
    %93 = vector.shape_cast %92 : vector<1x2x96xf32> to vector<2x96xf32>
    %94 = vector.extract_strided_slice %93 {offsets = [0, 48], sizes = [2, 48], strides = [1, 1]} : vector<2x96xf32> to vector<2x48xf32>
    %cst_35 = arith.constant dense<0.000000e+00> : vector<2x48xf32>
    %95 = tpu.matmul %56, %9, %cst_35 {dimension_numbers = #tpu.dot_dimension_numbers<[1], [0], [0], [1], [0, 0, 1, 1], [], []>} : vector<2x16xf32>, vector<16x48xf32>, vector<2x48xf32> -> vector<2x48xf32>
    %cst_36 = arith.constant dense<0.000000e+00> : vector<2x48xf32>
    %96 = tpu.matmul %83, %10, %cst_36 {dimension_numbers = #tpu.dot_dimension_numbers<[1], [0], [0], [1], [0, 0, 1, 1], [], []>} : vector<2x16xf32>, vector<16x48xf32>, vector<2x48xf32> -> vector<2x48xf32>
    %97 = vector.extract_strided_slice %89 {offsets = [0, 0], sizes = [2, 16], strides = [1, 1]} : vector<2x48xf32> to vector<2x16xf32>
    %98 = vector.extract_strided_slice %95 {offsets = [0, 0], sizes = [2, 16], strides = [1, 1]} : vector<2x48xf32> to vector<2x16xf32>
    %99 = arith.addf %97, %98 : vector<2x16xf32>
    %100 = arith.negf %99 : vector<2x16xf32>
    %101 = math.exp %100 : vector<2x16xf32>
    %cst_37 = arith.constant 1.000000e+00 : f32
    %102 = vector.broadcast %cst_37 : f32 to vector<2x16xf32>
    %103 = arith.addf %102, %101 : vector<2x16xf32>
    %104 = arith.divf %102, %103 : vector<2x16xf32>
    %105 = vector.extract_strided_slice %89 {offsets = [0, 16], sizes = [2, 16], strides = [1, 1]} : vector<2x48xf32> to vector<2x16xf32>
    %106 = vector.extract_strided_slice %95 {offsets = [0, 16], sizes = [2, 16], strides = [1, 1]} : vector<2x48xf32> to vector<2x16xf32>
    %107 = arith.addf %105, %106 : vector<2x16xf32>
    %108 = arith.negf %107 : vector<2x16xf32>
    %109 = math.exp %108 : vector<2x16xf32>
    %cst_38 = arith.constant 1.000000e+00 : f32
    %110 = vector.broadcast %cst_38 : f32 to vector<2x16xf32>
    %111 = arith.addf %110, %109 : vector<2x16xf32>
    %112 = arith.divf %110, %111 : vector<2x16xf32>
    %113 = vector.extract_strided_slice %89 {offsets = [0, 32], sizes = [2, 16], strides = [1, 1]} : vector<2x48xf32> to vector<2x16xf32>
    %114 = vector.extract_strided_slice %95 {offsets = [0, 32], sizes = [2, 16], strides = [1, 1]} : vector<2x48xf32> to vector<2x16xf32>
    %115 = arith.addf %114, %13 : vector<2x16xf32>
    %116 = arith.mulf %104, %115 : vector<2x16xf32>
    %117 = arith.addf %113, %116 : vector<2x16xf32>
    %118 = math.tanh %117 : vector<2x16xf32>
    %cst_39 = arith.constant 1.000000e+00 : f32
    %119 = vector.broadcast %cst_39 : f32 to vector<2x16xf32>
    %120 = arith.subf %119, %112 : vector<2x16xf32>
    %121 = arith.mulf %120, %118 : vector<2x16xf32>
    %122 = arith.mulf %112, %56 : vector<2x16xf32>
    %123 = arith.addf %121, %122 : vector<2x16xf32>
    %124 = vector.extract_strided_slice %94 {offsets = [0, 0], sizes = [2, 16], strides = [1, 1]} : vector<2x48xf32> to vector<2x16xf32>
    %125 = vector.extract_strided_slice %96 {offsets = [0, 0], sizes = [2, 16], strides = [1, 1]} : vector<2x48xf32> to vector<2x16xf32>
    %126 = arith.addf %124, %125 : vector<2x16xf32>
    %127 = arith.negf %126 : vector<2x16xf32>
    %128 = math.exp %127 : vector<2x16xf32>
    %cst_40 = arith.constant 1.000000e+00 : f32
    %129 = vector.broadcast %cst_40 : f32 to vector<2x16xf32>
    %130 = arith.addf %129, %128 : vector<2x16xf32>
    %131 = arith.divf %129, %130 : vector<2x16xf32>
    %132 = vector.extract_strided_slice %94 {offsets = [0, 16], sizes = [2, 16], strides = [1, 1]} : vector<2x48xf32> to vector<2x16xf32>
    %133 = vector.extract_strided_slice %96 {offsets = [0, 16], sizes = [2, 16], strides = [1, 1]} : vector<2x48xf32> to vector<2x16xf32>
    %134 = arith.addf %132, %133 : vector<2x16xf32>
    %135 = arith.negf %134 : vector<2x16xf32>
    %136 = math.exp %135 : vector<2x16xf32>
    %cst_41 = arith.constant 1.000000e+00 : f32
    %137 = vector.broadcast %cst_41 : f32 to vector<2x16xf32>
    %138 = arith.addf %137, %136 : vector<2x16xf32>
    %139 = arith.divf %137, %138 : vector<2x16xf32>
    %140 = vector.extract_strided_slice %94 {offsets = [0, 32], sizes = [2, 16], strides = [1, 1]} : vector<2x48xf32> to vector<2x16xf32>
    %141 = vector.extract_strided_slice %96 {offsets = [0, 32], sizes = [2, 16], strides = [1, 1]} : vector<2x48xf32> to vector<2x16xf32>
    %142 = arith.addf %141, %16 : vector<2x16xf32>
    %143 = arith.mulf %131, %142 : vector<2x16xf32>
    %144 = arith.addf %140, %143 : vector<2x16xf32>
    %145 = math.tanh %144 : vector<2x16xf32>
    %cst_42 = arith.constant 1.000000e+00 : f32
    %146 = vector.broadcast %cst_42 : f32 to vector<2x16xf32>
    %147 = arith.subf %146, %139 : vector<2x16xf32>
    %148 = arith.mulf %147, %145 : vector<2x16xf32>
    %149 = arith.mulf %139, %83 : vector<2x16xf32>
    %150 = arith.addf %148, %149 : vector<2x16xf32>
    %151 = arith.addf %84, %123 : vector<2x16xf32>
    %152 = arith.addf %85, %150 : vector<2x16xf32>
    %c2_i32 = arith.constant 2 : i32
    %153 = arith.index_cast %c2_i32 : i32 to index
    %c0_43 = arith.constant 0 : index
    %c0_44 = arith.constant 0 : index
    %154 = vector.load %arg8[%153, %c0_43, %c0_44] : memref<8x2x96xf32, #tpu.memory_space<vmem>>, vector<1x2x96xf32>
    %155 = vector.shape_cast %154 : vector<1x2x96xf32> to vector<2x96xf32>
    %156 = vector.extract_strided_slice %155 {offsets = [0, 0], sizes = [2, 48], strides = [1, 1]} : vector<2x96xf32> to vector<2x48xf32>
    %c7_i32_45 = arith.constant 7 : i32
    %157 = arith.subi %c7_i32_45, %c2_i32 : i32
    %158 = arith.index_cast %157 : i32 to index
    %c0_46 = arith.constant 0 : index
    %c0_47 = arith.constant 0 : index
    %159 = vector.load %arg8[%158, %c0_46, %c0_47] : memref<8x2x96xf32, #tpu.memory_space<vmem>>, vector<1x2x96xf32>
    %160 = vector.shape_cast %159 : vector<1x2x96xf32> to vector<2x96xf32>
    %161 = vector.extract_strided_slice %160 {offsets = [0, 48], sizes = [2, 48], strides = [1, 1]} : vector<2x96xf32> to vector<2x48xf32>
    %cst_48 = arith.constant dense<0.000000e+00> : vector<2x48xf32>
    %162 = tpu.matmul %123, %9, %cst_48 {dimension_numbers = #tpu.dot_dimension_numbers<[1], [0], [0], [1], [0, 0, 1, 1], [], []>} : vector<2x16xf32>, vector<16x48xf32>, vector<2x48xf32> -> vector<2x48xf32>
    %cst_49 = arith.constant dense<0.000000e+00> : vector<2x48xf32>
    %163 = tpu.matmul %150, %10, %cst_49 {dimension_numbers = #tpu.dot_dimension_numbers<[1], [0], [0], [1], [0, 0, 1, 1], [], []>} : vector<2x16xf32>, vector<16x48xf32>, vector<2x48xf32> -> vector<2x48xf32>
    %164 = vector.extract_strided_slice %156 {offsets = [0, 0], sizes = [2, 16], strides = [1, 1]} : vector<2x48xf32> to vector<2x16xf32>
    %165 = vector.extract_strided_slice %162 {offsets = [0, 0], sizes = [2, 16], strides = [1, 1]} : vector<2x48xf32> to vector<2x16xf32>
    %166 = arith.addf %164, %165 : vector<2x16xf32>
    %167 = arith.negf %166 : vector<2x16xf32>
    %168 = math.exp %167 : vector<2x16xf32>
    %cst_50 = arith.constant 1.000000e+00 : f32
    %169 = vector.broadcast %cst_50 : f32 to vector<2x16xf32>
    %170 = arith.addf %169, %168 : vector<2x16xf32>
    %171 = arith.divf %169, %170 : vector<2x16xf32>
    %172 = vector.extract_strided_slice %156 {offsets = [0, 16], sizes = [2, 16], strides = [1, 1]} : vector<2x48xf32> to vector<2x16xf32>
    %173 = vector.extract_strided_slice %162 {offsets = [0, 16], sizes = [2, 16], strides = [1, 1]} : vector<2x48xf32> to vector<2x16xf32>
    %174 = arith.addf %172, %173 : vector<2x16xf32>
    %175 = arith.negf %174 : vector<2x16xf32>
    %176 = math.exp %175 : vector<2x16xf32>
    %cst_51 = arith.constant 1.000000e+00 : f32
    %177 = vector.broadcast %cst_51 : f32 to vector<2x16xf32>
    %178 = arith.addf %177, %176 : vector<2x16xf32>
    %179 = arith.divf %177, %178 : vector<2x16xf32>
    %180 = vector.extract_strided_slice %156 {offsets = [0, 32], sizes = [2, 16], strides = [1, 1]} : vector<2x48xf32> to vector<2x16xf32>
    %181 = vector.extract_strided_slice %162 {offsets = [0, 32], sizes = [2, 16], strides = [1, 1]} : vector<2x48xf32> to vector<2x16xf32>
    %182 = arith.addf %181, %13 : vector<2x16xf32>
    %183 = arith.mulf %171, %182 : vector<2x16xf32>
    %184 = arith.addf %180, %183 : vector<2x16xf32>
    %185 = math.tanh %184 : vector<2x16xf32>
    %cst_52 = arith.constant 1.000000e+00 : f32
    %186 = vector.broadcast %cst_52 : f32 to vector<2x16xf32>
    %187 = arith.subf %186, %179 : vector<2x16xf32>
    %188 = arith.mulf %187, %185 : vector<2x16xf32>
    %189 = arith.mulf %179, %123 : vector<2x16xf32>
    %190 = arith.addf %188, %189 : vector<2x16xf32>
    %191 = vector.extract_strided_slice %161 {offsets = [0, 0], sizes = [2, 16], strides = [1, 1]} : vector<2x48xf32> to vector<2x16xf32>
    %192 = vector.extract_strided_slice %163 {offsets = [0, 0], sizes = [2, 16], strides = [1, 1]} : vector<2x48xf32> to vector<2x16xf32>
    %193 = arith.addf %191, %192 : vector<2x16xf32>
    %194 = arith.negf %193 : vector<2x16xf32>
    %195 = math.exp %194 : vector<2x16xf32>
    %cst_53 = arith.constant 1.000000e+00 : f32
    %196 = vector.broadcast %cst_53 : f32 to vector<2x16xf32>
    %197 = arith.addf %196, %195 : vector<2x16xf32>
    %198 = arith.divf %196, %197 : vector<2x16xf32>
    %199 = vector.extract_strided_slice %161 {offsets = [0, 16], sizes = [2, 16], strides = [1, 1]} : vector<2x48xf32> to vector<2x16xf32>
    %200 = vector.extract_strided_slice %163 {offsets = [0, 16], sizes = [2, 16], strides = [1, 1]} : vector<2x48xf32> to vector<2x16xf32>
    %201 = arith.addf %199, %200 : vector<2x16xf32>
    %202 = arith.negf %201 : vector<2x16xf32>
    %203 = math.exp %202 : vector<2x16xf32>
    %cst_54 = arith.constant 1.000000e+00 : f32
    %204 = vector.broadcast %cst_54 : f32 to vector<2x16xf32>
    %205 = arith.addf %204, %203 : vector<2x16xf32>
    %206 = arith.divf %204, %205 : vector<2x16xf32>
    %207 = vector.extract_strided_slice %161 {offsets = [0, 32], sizes = [2, 16], strides = [1, 1]} : vector<2x48xf32> to vector<2x16xf32>
    %208 = vector.extract_strided_slice %163 {offsets = [0, 32], sizes = [2, 16], strides = [1, 1]} : vector<2x48xf32> to vector<2x16xf32>
    %209 = arith.addf %208, %16 : vector<2x16xf32>
    %210 = arith.mulf %198, %209 : vector<2x16xf32>
    %211 = arith.addf %207, %210 : vector<2x16xf32>
    %212 = math.tanh %211 : vector<2x16xf32>
    %cst_55 = arith.constant 1.000000e+00 : f32
    %213 = vector.broadcast %cst_55 : f32 to vector<2x16xf32>
    %214 = arith.subf %213, %206 : vector<2x16xf32>
    %215 = arith.mulf %214, %212 : vector<2x16xf32>
    %216 = arith.mulf %206, %150 : vector<2x16xf32>
    %217 = arith.addf %215, %216 : vector<2x16xf32>
    %218 = arith.addf %151, %190 : vector<2x16xf32>
    %219 = arith.addf %152, %217 : vector<2x16xf32>
    %c3_i32 = arith.constant 3 : i32
    %220 = arith.index_cast %c3_i32 : i32 to index
    %c0_56 = arith.constant 0 : index
    %c0_57 = arith.constant 0 : index
    %221 = vector.load %arg8[%220, %c0_56, %c0_57] : memref<8x2x96xf32, #tpu.memory_space<vmem>>, vector<1x2x96xf32>
    %222 = vector.shape_cast %221 : vector<1x2x96xf32> to vector<2x96xf32>
    %223 = vector.extract_strided_slice %222 {offsets = [0, 0], sizes = [2, 48], strides = [1, 1]} : vector<2x96xf32> to vector<2x48xf32>
    %c7_i32_58 = arith.constant 7 : i32
    %224 = arith.subi %c7_i32_58, %c3_i32 : i32
    %225 = arith.index_cast %224 : i32 to index
    %c0_59 = arith.constant 0 : index
    %c0_60 = arith.constant 0 : index
    %226 = vector.load %arg8[%225, %c0_59, %c0_60] : memref<8x2x96xf32, #tpu.memory_space<vmem>>, vector<1x2x96xf32>
    %227 = vector.shape_cast %226 : vector<1x2x96xf32> to vector<2x96xf32>
    %228 = vector.extract_strided_slice %227 {offsets = [0, 48], sizes = [2, 48], strides = [1, 1]} : vector<2x96xf32> to vector<2x48xf32>
    %cst_61 = arith.constant dense<0.000000e+00> : vector<2x48xf32>
    %229 = tpu.matmul %190, %9, %cst_61 {dimension_numbers = #tpu.dot_dimension_numbers<[1], [0], [0], [1], [0, 0, 1, 1], [], []>} : vector<2x16xf32>, vector<16x48xf32>, vector<2x48xf32> -> vector<2x48xf32>
    %cst_62 = arith.constant dense<0.000000e+00> : vector<2x48xf32>
    %230 = tpu.matmul %217, %10, %cst_62 {dimension_numbers = #tpu.dot_dimension_numbers<[1], [0], [0], [1], [0, 0, 1, 1], [], []>} : vector<2x16xf32>, vector<16x48xf32>, vector<2x48xf32> -> vector<2x48xf32>
    %231 = vector.extract_strided_slice %223 {offsets = [0, 0], sizes = [2, 16], strides = [1, 1]} : vector<2x48xf32> to vector<2x16xf32>
    %232 = vector.extract_strided_slice %229 {offsets = [0, 0], sizes = [2, 16], strides = [1, 1]} : vector<2x48xf32> to vector<2x16xf32>
    %233 = arith.addf %231, %232 : vector<2x16xf32>
    %234 = arith.negf %233 : vector<2x16xf32>
    %235 = math.exp %234 : vector<2x16xf32>
    %cst_63 = arith.constant 1.000000e+00 : f32
    %236 = vector.broadcast %cst_63 : f32 to vector<2x16xf32>
    %237 = arith.addf %236, %235 : vector<2x16xf32>
    %238 = arith.divf %236, %237 : vector<2x16xf32>
    %239 = vector.extract_strided_slice %223 {offsets = [0, 16], sizes = [2, 16], strides = [1, 1]} : vector<2x48xf32> to vector<2x16xf32>
    %240 = vector.extract_strided_slice %229 {offsets = [0, 16], sizes = [2, 16], strides = [1, 1]} : vector<2x48xf32> to vector<2x16xf32>
    %241 = arith.addf %239, %240 : vector<2x16xf32>
    %242 = arith.negf %241 : vector<2x16xf32>
    %243 = math.exp %242 : vector<2x16xf32>
    %cst_64 = arith.constant 1.000000e+00 : f32
    %244 = vector.broadcast %cst_64 : f32 to vector<2x16xf32>
    %245 = arith.addf %244, %243 : vector<2x16xf32>
    %246 = arith.divf %244, %245 : vector<2x16xf32>
    %247 = vector.extract_strided_slice %223 {offsets = [0, 32], sizes = [2, 16], strides = [1, 1]} : vector<2x48xf32> to vector<2x16xf32>
    %248 = vector.extract_strided_slice %229 {offsets = [0, 32], sizes = [2, 16], strides = [1, 1]} : vector<2x48xf32> to vector<2x16xf32>
    %249 = arith.addf %248, %13 : vector<2x16xf32>
    %250 = arith.mulf %238, %249 : vector<2x16xf32>
    %251 = arith.addf %247, %250 : vector<2x16xf32>
    %252 = math.tanh %251 : vector<2x16xf32>
    %cst_65 = arith.constant 1.000000e+00 : f32
    %253 = vector.broadcast %cst_65 : f32 to vector<2x16xf32>
    %254 = arith.subf %253, %246 : vector<2x16xf32>
    %255 = arith.mulf %254, %252 : vector<2x16xf32>
    %256 = arith.mulf %246, %190 : vector<2x16xf32>
    %257 = arith.addf %255, %256 : vector<2x16xf32>
    %258 = vector.extract_strided_slice %228 {offsets = [0, 0], sizes = [2, 16], strides = [1, 1]} : vector<2x48xf32> to vector<2x16xf32>
    %259 = vector.extract_strided_slice %230 {offsets = [0, 0], sizes = [2, 16], strides = [1, 1]} : vector<2x48xf32> to vector<2x16xf32>
    %260 = arith.addf %258, %259 : vector<2x16xf32>
    %261 = arith.negf %260 : vector<2x16xf32>
    %262 = math.exp %261 : vector<2x16xf32>
    %cst_66 = arith.constant 1.000000e+00 : f32
    %263 = vector.broadcast %cst_66 : f32 to vector<2x16xf32>
    %264 = arith.addf %263, %262 : vector<2x16xf32>
    %265 = arith.divf %263, %264 : vector<2x16xf32>
    %266 = vector.extract_strided_slice %228 {offsets = [0, 16], sizes = [2, 16], strides = [1, 1]} : vector<2x48xf32> to vector<2x16xf32>
    %267 = vector.extract_strided_slice %230 {offsets = [0, 16], sizes = [2, 16], strides = [1, 1]} : vector<2x48xf32> to vector<2x16xf32>
    %268 = arith.addf %266, %267 : vector<2x16xf32>
    %269 = arith.negf %268 : vector<2x16xf32>
    %270 = math.exp %269 : vector<2x16xf32>
    %cst_67 = arith.constant 1.000000e+00 : f32
    %271 = vector.broadcast %cst_67 : f32 to vector<2x16xf32>
    %272 = arith.addf %271, %270 : vector<2x16xf32>
    %273 = arith.divf %271, %272 : vector<2x16xf32>
    %274 = vector.extract_strided_slice %228 {offsets = [0, 32], sizes = [2, 16], strides = [1, 1]} : vector<2x48xf32> to vector<2x16xf32>
    %275 = vector.extract_strided_slice %230 {offsets = [0, 32], sizes = [2, 16], strides = [1, 1]} : vector<2x48xf32> to vector<2x16xf32>
    %276 = arith.addf %275, %16 : vector<2x16xf32>
    %277 = arith.mulf %265, %276 : vector<2x16xf32>
    %278 = arith.addf %274, %277 : vector<2x16xf32>
    %279 = math.tanh %278 : vector<2x16xf32>
    %cst_68 = arith.constant 1.000000e+00 : f32
    %280 = vector.broadcast %cst_68 : f32 to vector<2x16xf32>
    %281 = arith.subf %280, %273 : vector<2x16xf32>
    %282 = arith.mulf %281, %279 : vector<2x16xf32>
    %283 = arith.mulf %273, %217 : vector<2x16xf32>
    %284 = arith.addf %282, %283 : vector<2x16xf32>
    %285 = arith.addf %218, %257 : vector<2x16xf32>
    %286 = arith.addf %219, %284 : vector<2x16xf32>
    %c4_i32 = arith.constant 4 : i32
    %287 = arith.index_cast %c4_i32 : i32 to index
    %c0_69 = arith.constant 0 : index
    %c0_70 = arith.constant 0 : index
    %288 = vector.load %arg8[%287, %c0_69, %c0_70] : memref<8x2x96xf32, #tpu.memory_space<vmem>>, vector<1x2x96xf32>
    %289 = vector.shape_cast %288 : vector<1x2x96xf32> to vector<2x96xf32>
    %290 = vector.extract_strided_slice %289 {offsets = [0, 0], sizes = [2, 48], strides = [1, 1]} : vector<2x96xf32> to vector<2x48xf32>
    %c7_i32_71 = arith.constant 7 : i32
    %291 = arith.subi %c7_i32_71, %c4_i32 : i32
    %292 = arith.index_cast %291 : i32 to index
    %c0_72 = arith.constant 0 : index
    %c0_73 = arith.constant 0 : index
    %293 = vector.load %arg8[%292, %c0_72, %c0_73] : memref<8x2x96xf32, #tpu.memory_space<vmem>>, vector<1x2x96xf32>
    %294 = vector.shape_cast %293 : vector<1x2x96xf32> to vector<2x96xf32>
    %295 = vector.extract_strided_slice %294 {offsets = [0, 48], sizes = [2, 48], strides = [1, 1]} : vector<2x96xf32> to vector<2x48xf32>
    %cst_74 = arith.constant dense<0.000000e+00> : vector<2x48xf32>
    %296 = tpu.matmul %257, %9, %cst_74 {dimension_numbers = #tpu.dot_dimension_numbers<[1], [0], [0], [1], [0, 0, 1, 1], [], []>} : vector<2x16xf32>, vector<16x48xf32>, vector<2x48xf32> -> vector<2x48xf32>
    %cst_75 = arith.constant dense<0.000000e+00> : vector<2x48xf32>
    %297 = tpu.matmul %284, %10, %cst_75 {dimension_numbers = #tpu.dot_dimension_numbers<[1], [0], [0], [1], [0, 0, 1, 1], [], []>} : vector<2x16xf32>, vector<16x48xf32>, vector<2x48xf32> -> vector<2x48xf32>
    %298 = vector.extract_strided_slice %290 {offsets = [0, 0], sizes = [2, 16], strides = [1, 1]} : vector<2x48xf32> to vector<2x16xf32>
    %299 = vector.extract_strided_slice %296 {offsets = [0, 0], sizes = [2, 16], strides = [1, 1]} : vector<2x48xf32> to vector<2x16xf32>
    %300 = arith.addf %298, %299 : vector<2x16xf32>
    %301 = arith.negf %300 : vector<2x16xf32>
    %302 = math.exp %301 : vector<2x16xf32>
    %cst_76 = arith.constant 1.000000e+00 : f32
    %303 = vector.broadcast %cst_76 : f32 to vector<2x16xf32>
    %304 = arith.addf %303, %302 : vector<2x16xf32>
    %305 = arith.divf %303, %304 : vector<2x16xf32>
    %306 = vector.extract_strided_slice %290 {offsets = [0, 16], sizes = [2, 16], strides = [1, 1]} : vector<2x48xf32> to vector<2x16xf32>
    %307 = vector.extract_strided_slice %296 {offsets = [0, 16], sizes = [2, 16], strides = [1, 1]} : vector<2x48xf32> to vector<2x16xf32>
    %308 = arith.addf %306, %307 : vector<2x16xf32>
    %309 = arith.negf %308 : vector<2x16xf32>
    %310 = math.exp %309 : vector<2x16xf32>
    %cst_77 = arith.constant 1.000000e+00 : f32
    %311 = vector.broadcast %cst_77 : f32 to vector<2x16xf32>
    %312 = arith.addf %311, %310 : vector<2x16xf32>
    %313 = arith.divf %311, %312 : vector<2x16xf32>
    %314 = vector.extract_strided_slice %290 {offsets = [0, 32], sizes = [2, 16], strides = [1, 1]} : vector<2x48xf32> to vector<2x16xf32>
    %315 = vector.extract_strided_slice %296 {offsets = [0, 32], sizes = [2, 16], strides = [1, 1]} : vector<2x48xf32> to vector<2x16xf32>
    %316 = arith.addf %315, %13 : vector<2x16xf32>
    %317 = arith.mulf %305, %316 : vector<2x16xf32>
    %318 = arith.addf %314, %317 : vector<2x16xf32>
    %319 = math.tanh %318 : vector<2x16xf32>
    %cst_78 = arith.constant 1.000000e+00 : f32
    %320 = vector.broadcast %cst_78 : f32 to vector<2x16xf32>
    %321 = arith.subf %320, %313 : vector<2x16xf32>
    %322 = arith.mulf %321, %319 : vector<2x16xf32>
    %323 = arith.mulf %313, %257 : vector<2x16xf32>
    %324 = arith.addf %322, %323 : vector<2x16xf32>
    %325 = vector.extract_strided_slice %295 {offsets = [0, 0], sizes = [2, 16], strides = [1, 1]} : vector<2x48xf32> to vector<2x16xf32>
    %326 = vector.extract_strided_slice %297 {offsets = [0, 0], sizes = [2, 16], strides = [1, 1]} : vector<2x48xf32> to vector<2x16xf32>
    %327 = arith.addf %325, %326 : vector<2x16xf32>
    %328 = arith.negf %327 : vector<2x16xf32>
    %329 = math.exp %328 : vector<2x16xf32>
    %cst_79 = arith.constant 1.000000e+00 : f32
    %330 = vector.broadcast %cst_79 : f32 to vector<2x16xf32>
    %331 = arith.addf %330, %329 : vector<2x16xf32>
    %332 = arith.divf %330, %331 : vector<2x16xf32>
    %333 = vector.extract_strided_slice %295 {offsets = [0, 16], sizes = [2, 16], strides = [1, 1]} : vector<2x48xf32> to vector<2x16xf32>
    %334 = vector.extract_strided_slice %297 {offsets = [0, 16], sizes = [2, 16], strides = [1, 1]} : vector<2x48xf32> to vector<2x16xf32>
    %335 = arith.addf %333, %334 : vector<2x16xf32>
    %336 = arith.negf %335 : vector<2x16xf32>
    %337 = math.exp %336 : vector<2x16xf32>
    %cst_80 = arith.constant 1.000000e+00 : f32
    %338 = vector.broadcast %cst_80 : f32 to vector<2x16xf32>
    %339 = arith.addf %338, %337 : vector<2x16xf32>
    %340 = arith.divf %338, %339 : vector<2x16xf32>
    %341 = vector.extract_strided_slice %295 {offsets = [0, 32], sizes = [2, 16], strides = [1, 1]} : vector<2x48xf32> to vector<2x16xf32>
    %342 = vector.extract_strided_slice %297 {offsets = [0, 32], sizes = [2, 16], strides = [1, 1]} : vector<2x48xf32> to vector<2x16xf32>
    %343 = arith.addf %342, %16 : vector<2x16xf32>
    %344 = arith.mulf %332, %343 : vector<2x16xf32>
    %345 = arith.addf %341, %344 : vector<2x16xf32>
    %346 = math.tanh %345 : vector<2x16xf32>
    %cst_81 = arith.constant 1.000000e+00 : f32
    %347 = vector.broadcast %cst_81 : f32 to vector<2x16xf32>
    %348 = arith.subf %347, %340 : vector<2x16xf32>
    %349 = arith.mulf %348, %346 : vector<2x16xf32>
    %350 = arith.mulf %340, %284 : vector<2x16xf32>
    %351 = arith.addf %349, %350 : vector<2x16xf32>
    %352 = arith.addf %285, %324 : vector<2x16xf32>
    %353 = arith.addf %286, %351 : vector<2x16xf32>
    %c5_i32 = arith.constant 5 : i32
    %354 = arith.index_cast %c5_i32 : i32 to index
    %c0_82 = arith.constant 0 : index
    %c0_83 = arith.constant 0 : index
    %355 = vector.load %arg8[%354, %c0_82, %c0_83] : memref<8x2x96xf32, #tpu.memory_space<vmem>>, vector<1x2x96xf32>
    %356 = vector.shape_cast %355 : vector<1x2x96xf32> to vector<2x96xf32>
    %357 = vector.extract_strided_slice %356 {offsets = [0, 0], sizes = [2, 48], strides = [1, 1]} : vector<2x96xf32> to vector<2x48xf32>
    %c7_i32_84 = arith.constant 7 : i32
    %358 = arith.subi %c7_i32_84, %c5_i32 : i32
    %359 = arith.index_cast %358 : i32 to index
    %c0_85 = arith.constant 0 : index
    %c0_86 = arith.constant 0 : index
    %360 = vector.load %arg8[%359, %c0_85, %c0_86] : memref<8x2x96xf32, #tpu.memory_space<vmem>>, vector<1x2x96xf32>
    %361 = vector.shape_cast %360 : vector<1x2x96xf32> to vector<2x96xf32>
    %362 = vector.extract_strided_slice %361 {offsets = [0, 48], sizes = [2, 48], strides = [1, 1]} : vector<2x96xf32> to vector<2x48xf32>
    %cst_87 = arith.constant dense<0.000000e+00> : vector<2x48xf32>
    %363 = tpu.matmul %324, %9, %cst_87 {dimension_numbers = #tpu.dot_dimension_numbers<[1], [0], [0], [1], [0, 0, 1, 1], [], []>} : vector<2x16xf32>, vector<16x48xf32>, vector<2x48xf32> -> vector<2x48xf32>
    %cst_88 = arith.constant dense<0.000000e+00> : vector<2x48xf32>
    %364 = tpu.matmul %351, %10, %cst_88 {dimension_numbers = #tpu.dot_dimension_numbers<[1], [0], [0], [1], [0, 0, 1, 1], [], []>} : vector<2x16xf32>, vector<16x48xf32>, vector<2x48xf32> -> vector<2x48xf32>
    %365 = vector.extract_strided_slice %357 {offsets = [0, 0], sizes = [2, 16], strides = [1, 1]} : vector<2x48xf32> to vector<2x16xf32>
    %366 = vector.extract_strided_slice %363 {offsets = [0, 0], sizes = [2, 16], strides = [1, 1]} : vector<2x48xf32> to vector<2x16xf32>
    %367 = arith.addf %365, %366 : vector<2x16xf32>
    %368 = arith.negf %367 : vector<2x16xf32>
    %369 = math.exp %368 : vector<2x16xf32>
    %cst_89 = arith.constant 1.000000e+00 : f32
    %370 = vector.broadcast %cst_89 : f32 to vector<2x16xf32>
    %371 = arith.addf %370, %369 : vector<2x16xf32>
    %372 = arith.divf %370, %371 : vector<2x16xf32>
    %373 = vector.extract_strided_slice %357 {offsets = [0, 16], sizes = [2, 16], strides = [1, 1]} : vector<2x48xf32> to vector<2x16xf32>
    %374 = vector.extract_strided_slice %363 {offsets = [0, 16], sizes = [2, 16], strides = [1, 1]} : vector<2x48xf32> to vector<2x16xf32>
    %375 = arith.addf %373, %374 : vector<2x16xf32>
    %376 = arith.negf %375 : vector<2x16xf32>
    %377 = math.exp %376 : vector<2x16xf32>
    %cst_90 = arith.constant 1.000000e+00 : f32
    %378 = vector.broadcast %cst_90 : f32 to vector<2x16xf32>
    %379 = arith.addf %378, %377 : vector<2x16xf32>
    %380 = arith.divf %378, %379 : vector<2x16xf32>
    %381 = vector.extract_strided_slice %357 {offsets = [0, 32], sizes = [2, 16], strides = [1, 1]} : vector<2x48xf32> to vector<2x16xf32>
    %382 = vector.extract_strided_slice %363 {offsets = [0, 32], sizes = [2, 16], strides = [1, 1]} : vector<2x48xf32> to vector<2x16xf32>
    %383 = arith.addf %382, %13 : vector<2x16xf32>
    %384 = arith.mulf %372, %383 : vector<2x16xf32>
    %385 = arith.addf %381, %384 : vector<2x16xf32>
    %386 = math.tanh %385 : vector<2x16xf32>
    %cst_91 = arith.constant 1.000000e+00 : f32
    %387 = vector.broadcast %cst_91 : f32 to vector<2x16xf32>
    %388 = arith.subf %387, %380 : vector<2x16xf32>
    %389 = arith.mulf %388, %386 : vector<2x16xf32>
    %390 = arith.mulf %380, %324 : vector<2x16xf32>
    %391 = arith.addf %389, %390 : vector<2x16xf32>
    %392 = vector.extract_strided_slice %362 {offsets = [0, 0], sizes = [2, 16], strides = [1, 1]} : vector<2x48xf32> to vector<2x16xf32>
    %393 = vector.extract_strided_slice %364 {offsets = [0, 0], sizes = [2, 16], strides = [1, 1]} : vector<2x48xf32> to vector<2x16xf32>
    %394 = arith.addf %392, %393 : vector<2x16xf32>
    %395 = arith.negf %394 : vector<2x16xf32>
    %396 = math.exp %395 : vector<2x16xf32>
    %cst_92 = arith.constant 1.000000e+00 : f32
    %397 = vector.broadcast %cst_92 : f32 to vector<2x16xf32>
    %398 = arith.addf %397, %396 : vector<2x16xf32>
    %399 = arith.divf %397, %398 : vector<2x16xf32>
    %400 = vector.extract_strided_slice %362 {offsets = [0, 16], sizes = [2, 16], strides = [1, 1]} : vector<2x48xf32> to vector<2x16xf32>
    %401 = vector.extract_strided_slice %364 {offsets = [0, 16], sizes = [2, 16], strides = [1, 1]} : vector<2x48xf32> to vector<2x16xf32>
    %402 = arith.addf %400, %401 : vector<2x16xf32>
    %403 = arith.negf %402 : vector<2x16xf32>
    %404 = math.exp %403 : vector<2x16xf32>
    %cst_93 = arith.constant 1.000000e+00 : f32
    %405 = vector.broadcast %cst_93 : f32 to vector<2x16xf32>
    %406 = arith.addf %405, %404 : vector<2x16xf32>
    %407 = arith.divf %405, %406 : vector<2x16xf32>
    %408 = vector.extract_strided_slice %362 {offsets = [0, 32], sizes = [2, 16], strides = [1, 1]} : vector<2x48xf32> to vector<2x16xf32>
    %409 = vector.extract_strided_slice %364 {offsets = [0, 32], sizes = [2, 16], strides = [1, 1]} : vector<2x48xf32> to vector<2x16xf32>
    %410 = arith.addf %409, %16 : vector<2x16xf32>
    %411 = arith.mulf %399, %410 : vector<2x16xf32>
    %412 = arith.addf %408, %411 : vector<2x16xf32>
    %413 = math.tanh %412 : vector<2x16xf32>
    %cst_94 = arith.constant 1.000000e+00 : f32
    %414 = vector.broadcast %cst_94 : f32 to vector<2x16xf32>
    %415 = arith.subf %414, %407 : vector<2x16xf32>
    %416 = arith.mulf %415, %413 : vector<2x16xf32>
    %417 = arith.mulf %407, %351 : vector<2x16xf32>
    %418 = arith.addf %416, %417 : vector<2x16xf32>
    %419 = arith.addf %352, %391 : vector<2x16xf32>
    %420 = arith.addf %353, %418 : vector<2x16xf32>
    %c6_i32 = arith.constant 6 : i32
    %421 = arith.index_cast %c6_i32 : i32 to index
    %c0_95 = arith.constant 0 : index
    %c0_96 = arith.constant 0 : index
    %422 = vector.load %arg8[%421, %c0_95, %c0_96] : memref<8x2x96xf32, #tpu.memory_space<vmem>>, vector<1x2x96xf32>
    %423 = vector.shape_cast %422 : vector<1x2x96xf32> to vector<2x96xf32>
    %424 = vector.extract_strided_slice %423 {offsets = [0, 0], sizes = [2, 48], strides = [1, 1]} : vector<2x96xf32> to vector<2x48xf32>
    %c7_i32_97 = arith.constant 7 : i32
    %425 = arith.subi %c7_i32_97, %c6_i32 : i32
    %426 = arith.index_cast %425 : i32 to index
    %c0_98 = arith.constant 0 : index
    %c0_99 = arith.constant 0 : index
    %427 = vector.load %arg8[%426, %c0_98, %c0_99] : memref<8x2x96xf32, #tpu.memory_space<vmem>>, vector<1x2x96xf32>
    %428 = vector.shape_cast %427 : vector<1x2x96xf32> to vector<2x96xf32>
    %429 = vector.extract_strided_slice %428 {offsets = [0, 48], sizes = [2, 48], strides = [1, 1]} : vector<2x96xf32> to vector<2x48xf32>
    %cst_100 = arith.constant dense<0.000000e+00> : vector<2x48xf32>
    %430 = tpu.matmul %391, %9, %cst_100 {dimension_numbers = #tpu.dot_dimension_numbers<[1], [0], [0], [1], [0, 0, 1, 1], [], []>} : vector<2x16xf32>, vector<16x48xf32>, vector<2x48xf32> -> vector<2x48xf32>
    %cst_101 = arith.constant dense<0.000000e+00> : vector<2x48xf32>
    %431 = tpu.matmul %418, %10, %cst_101 {dimension_numbers = #tpu.dot_dimension_numbers<[1], [0], [0], [1], [0, 0, 1, 1], [], []>} : vector<2x16xf32>, vector<16x48xf32>, vector<2x48xf32> -> vector<2x48xf32>
    %432 = vector.extract_strided_slice %424 {offsets = [0, 0], sizes = [2, 16], strides = [1, 1]} : vector<2x48xf32> to vector<2x16xf32>
    %433 = vector.extract_strided_slice %430 {offsets = [0, 0], sizes = [2, 16], strides = [1, 1]} : vector<2x48xf32> to vector<2x16xf32>
    %434 = arith.addf %432, %433 : vector<2x16xf32>
    %435 = arith.negf %434 : vector<2x16xf32>
    %436 = math.exp %435 : vector<2x16xf32>
    %cst_102 = arith.constant 1.000000e+00 : f32
    %437 = vector.broadcast %cst_102 : f32 to vector<2x16xf32>
    %438 = arith.addf %437, %436 : vector<2x16xf32>
    %439 = arith.divf %437, %438 : vector<2x16xf32>
    %440 = vector.extract_strided_slice %424 {offsets = [0, 16], sizes = [2, 16], strides = [1, 1]} : vector<2x48xf32> to vector<2x16xf32>
    %441 = vector.extract_strided_slice %430 {offsets = [0, 16], sizes = [2, 16], strides = [1, 1]} : vector<2x48xf32> to vector<2x16xf32>
    %442 = arith.addf %440, %441 : vector<2x16xf32>
    %443 = arith.negf %442 : vector<2x16xf32>
    %444 = math.exp %443 : vector<2x16xf32>
    %cst_103 = arith.constant 1.000000e+00 : f32
    %445 = vector.broadcast %cst_103 : f32 to vector<2x16xf32>
    %446 = arith.addf %445, %444 : vector<2x16xf32>
    %447 = arith.divf %445, %446 : vector<2x16xf32>
    %448 = vector.extract_strided_slice %424 {offsets = [0, 32], sizes = [2, 16], strides = [1, 1]} : vector<2x48xf32> to vector<2x16xf32>
    %449 = vector.extract_strided_slice %430 {offsets = [0, 32], sizes = [2, 16], strides = [1, 1]} : vector<2x48xf32> to vector<2x16xf32>
    %450 = arith.addf %449, %13 : vector<2x16xf32>
    %451 = arith.mulf %439, %450 : vector<2x16xf32>
    %452 = arith.addf %448, %451 : vector<2x16xf32>
    %453 = math.tanh %452 : vector<2x16xf32>
    %cst_104 = arith.constant 1.000000e+00 : f32
    %454 = vector.broadcast %cst_104 : f32 to vector<2x16xf32>
    %455 = arith.subf %454, %447 : vector<2x16xf32>
    %456 = arith.mulf %455, %453 : vector<2x16xf32>
    %457 = arith.mulf %447, %391 : vector<2x16xf32>
    %458 = arith.addf %456, %457 : vector<2x16xf32>
    %459 = vector.extract_strided_slice %429 {offsets = [0, 0], sizes = [2, 16], strides = [1, 1]} : vector<2x48xf32> to vector<2x16xf32>
    %460 = vector.extract_strided_slice %431 {offsets = [0, 0], sizes = [2, 16], strides = [1, 1]} : vector<2x48xf32> to vector<2x16xf32>
    %461 = arith.addf %459, %460 : vector<2x16xf32>
    %462 = arith.negf %461 : vector<2x16xf32>
    %463 = math.exp %462 : vector<2x16xf32>
    %cst_105 = arith.constant 1.000000e+00 : f32
    %464 = vector.broadcast %cst_105 : f32 to vector<2x16xf32>
    %465 = arith.addf %464, %463 : vector<2x16xf32>
    %466 = arith.divf %464, %465 : vector<2x16xf32>
    %467 = vector.extract_strided_slice %429 {offsets = [0, 16], sizes = [2, 16], strides = [1, 1]} : vector<2x48xf32> to vector<2x16xf32>
    %468 = vector.extract_strided_slice %431 {offsets = [0, 16], sizes = [2, 16], strides = [1, 1]} : vector<2x48xf32> to vector<2x16xf32>
    %469 = arith.addf %467, %468 : vector<2x16xf32>
    %470 = arith.negf %469 : vector<2x16xf32>
    %471 = math.exp %470 : vector<2x16xf32>
    %cst_106 = arith.constant 1.000000e+00 : f32
    %472 = vector.broadcast %cst_106 : f32 to vector<2x16xf32>
    %473 = arith.addf %472, %471 : vector<2x16xf32>
    %474 = arith.divf %472, %473 : vector<2x16xf32>
    %475 = vector.extract_strided_slice %429 {offsets = [0, 32], sizes = [2, 16], strides = [1, 1]} : vector<2x48xf32> to vector<2x16xf32>
    %476 = vector.extract_strided_slice %431 {offsets = [0, 32], sizes = [2, 16], strides = [1, 1]} : vector<2x48xf32> to vector<2x16xf32>
    %477 = arith.addf %476, %16 : vector<2x16xf32>
    %478 = arith.mulf %466, %477 : vector<2x16xf32>
    %479 = arith.addf %475, %478 : vector<2x16xf32>
    %480 = math.tanh %479 : vector<2x16xf32>
    %cst_107 = arith.constant 1.000000e+00 : f32
    %481 = vector.broadcast %cst_107 : f32 to vector<2x16xf32>
    %482 = arith.subf %481, %474 : vector<2x16xf32>
    %483 = arith.mulf %482, %480 : vector<2x16xf32>
    %484 = arith.mulf %474, %418 : vector<2x16xf32>
    %485 = arith.addf %483, %484 : vector<2x16xf32>
    %486 = arith.addf %419, %458 : vector<2x16xf32>
    %487 = arith.addf %420, %485 : vector<2x16xf32>
    %c7_i32_108 = arith.constant 7 : i32
    %488 = arith.index_cast %c7_i32_108 : i32 to index
    %c0_109 = arith.constant 0 : index
    %c0_110 = arith.constant 0 : index
    %489 = vector.load %arg8[%488, %c0_109, %c0_110] : memref<8x2x96xf32, #tpu.memory_space<vmem>>, vector<1x2x96xf32>
    %490 = vector.shape_cast %489 : vector<1x2x96xf32> to vector<2x96xf32>
    %491 = vector.extract_strided_slice %490 {offsets = [0, 0], sizes = [2, 48], strides = [1, 1]} : vector<2x96xf32> to vector<2x48xf32>
    %c7_i32_111 = arith.constant 7 : i32
    %492 = arith.subi %c7_i32_111, %c7_i32_108 : i32
    %493 = arith.index_cast %492 : i32 to index
    %c0_112 = arith.constant 0 : index
    %c0_113 = arith.constant 0 : index
    %494 = vector.load %arg8[%493, %c0_112, %c0_113] : memref<8x2x96xf32, #tpu.memory_space<vmem>>, vector<1x2x96xf32>
    %495 = vector.shape_cast %494 : vector<1x2x96xf32> to vector<2x96xf32>
    %496 = vector.extract_strided_slice %495 {offsets = [0, 48], sizes = [2, 48], strides = [1, 1]} : vector<2x96xf32> to vector<2x48xf32>
    %cst_114 = arith.constant dense<0.000000e+00> : vector<2x48xf32>
    %497 = tpu.matmul %458, %9, %cst_114 {dimension_numbers = #tpu.dot_dimension_numbers<[1], [0], [0], [1], [0, 0, 1, 1], [], []>} : vector<2x16xf32>, vector<16x48xf32>, vector<2x48xf32> -> vector<2x48xf32>
    %cst_115 = arith.constant dense<0.000000e+00> : vector<2x48xf32>
    %498 = tpu.matmul %485, %10, %cst_115 {dimension_numbers = #tpu.dot_dimension_numbers<[1], [0], [0], [1], [0, 0, 1, 1], [], []>} : vector<2x16xf32>, vector<16x48xf32>, vector<2x48xf32> -> vector<2x48xf32>
    %499 = vector.extract_strided_slice %491 {offsets = [0, 0], sizes = [2, 16], strides = [1, 1]} : vector<2x48xf32> to vector<2x16xf32>
    %500 = vector.extract_strided_slice %497 {offsets = [0, 0], sizes = [2, 16], strides = [1, 1]} : vector<2x48xf32> to vector<2x16xf32>
    %501 = arith.addf %499, %500 : vector<2x16xf32>
    %502 = arith.negf %501 : vector<2x16xf32>
    %503 = math.exp %502 : vector<2x16xf32>
    %cst_116 = arith.constant 1.000000e+00 : f32
    %504 = vector.broadcast %cst_116 : f32 to vector<2x16xf32>
    %505 = arith.addf %504, %503 : vector<2x16xf32>
    %506 = arith.divf %504, %505 : vector<2x16xf32>
    %507 = vector.extract_strided_slice %491 {offsets = [0, 16], sizes = [2, 16], strides = [1, 1]} : vector<2x48xf32> to vector<2x16xf32>
    %508 = vector.extract_strided_slice %497 {offsets = [0, 16], sizes = [2, 16], strides = [1, 1]} : vector<2x48xf32> to vector<2x16xf32>
    %509 = arith.addf %507, %508 : vector<2x16xf32>
    %510 = arith.negf %509 : vector<2x16xf32>
    %511 = math.exp %510 : vector<2x16xf32>
    %cst_117 = arith.constant 1.000000e+00 : f32
    %512 = vector.broadcast %cst_117 : f32 to vector<2x16xf32>
    %513 = arith.addf %512, %511 : vector<2x16xf32>
    %514 = arith.divf %512, %513 : vector<2x16xf32>
    %515 = vector.extract_strided_slice %491 {offsets = [0, 32], sizes = [2, 16], strides = [1, 1]} : vector<2x48xf32> to vector<2x16xf32>
    %516 = vector.extract_strided_slice %497 {offsets = [0, 32], sizes = [2, 16], strides = [1, 1]} : vector<2x48xf32> to vector<2x16xf32>
    %517 = arith.addf %516, %13 : vector<2x16xf32>
    %518 = arith.mulf %506, %517 : vector<2x16xf32>
    %519 = arith.addf %515, %518 : vector<2x16xf32>
    %520 = math.tanh %519 : vector<2x16xf32>
    %cst_118 = arith.constant 1.000000e+00 : f32
    %521 = vector.broadcast %cst_118 : f32 to vector<2x16xf32>
    %522 = arith.subf %521, %514 : vector<2x16xf32>
    %523 = arith.mulf %522, %520 : vector<2x16xf32>
    %524 = arith.mulf %514, %458 : vector<2x16xf32>
    %525 = arith.addf %523, %524 : vector<2x16xf32>
    %526 = vector.extract_strided_slice %496 {offsets = [0, 0], sizes = [2, 16], strides = [1, 1]} : vector<2x48xf32> to vector<2x16xf32>
    %527 = vector.extract_strided_slice %498 {offsets = [0, 0], sizes = [2, 16], strides = [1, 1]} : vector<2x48xf32> to vector<2x16xf32>
    %528 = arith.addf %526, %527 : vector<2x16xf32>
    %529 = arith.negf %528 : vector<2x16xf32>
    %530 = math.exp %529 : vector<2x16xf32>
    %cst_119 = arith.constant 1.000000e+00 : f32
    %531 = vector.broadcast %cst_119 : f32 to vector<2x16xf32>
    %532 = arith.addf %531, %530 : vector<2x16xf32>
    %533 = arith.divf %531, %532 : vector<2x16xf32>
    %534 = vector.extract_strided_slice %496 {offsets = [0, 16], sizes = [2, 16], strides = [1, 1]} : vector<2x48xf32> to vector<2x16xf32>
    %535 = vector.extract_strided_slice %498 {offsets = [0, 16], sizes = [2, 16], strides = [1, 1]} : vector<2x48xf32> to vector<2x16xf32>
    %536 = arith.addf %534, %535 : vector<2x16xf32>
    %537 = arith.negf %536 : vector<2x16xf32>
    %538 = math.exp %537 : vector<2x16xf32>
    %cst_120 = arith.constant 1.000000e+00 : f32
    %539 = vector.broadcast %cst_120 : f32 to vector<2x16xf32>
    %540 = arith.addf %539, %538 : vector<2x16xf32>
    %541 = arith.divf %539, %540 : vector<2x16xf32>
    %542 = vector.extract_strided_slice %496 {offsets = [0, 32], sizes = [2, 16], strides = [1, 1]} : vector<2x48xf32> to vector<2x16xf32>
    %543 = vector.extract_strided_slice %498 {offsets = [0, 32], sizes = [2, 16], strides = [1, 1]} : vector<2x48xf32> to vector<2x16xf32>
    %544 = arith.addf %543, %16 : vector<2x16xf32>
    %545 = arith.mulf %533, %544 : vector<2x16xf32>
    %546 = arith.addf %542, %545 : vector<2x16xf32>
    %547 = math.tanh %546 : vector<2x16xf32>
    %cst_121 = arith.constant 1.000000e+00 : f32
    %548 = vector.broadcast %cst_121 : f32 to vector<2x16xf32>
    %549 = arith.subf %548, %541 : vector<2x16xf32>
    %550 = arith.mulf %549, %547 : vector<2x16xf32>
    %551 = arith.mulf %541, %485 : vector<2x16xf32>
    %552 = arith.addf %550, %551 : vector<2x16xf32>
    %553 = arith.addf %486, %525 : vector<2x16xf32>
    %554 = arith.addf %487, %552 : vector<2x16xf32>
    %c8_i32 = arith.constant 8 : i32
    %555 = tpu.concatenate %553, %554 in 1 : vector<2x16xf32>, vector<2x16xf32> -> vector<2x32xf32>
    %cst_122 = arith.constant 1.250000e-01 : f32
    %556 = vector.broadcast %cst_122 : f32 to vector<2x32xf32>
    %557 = arith.mulf %555, %556 : vector<2x32xf32>
    %c0_123 = arith.constant 0 : index
    %c0_124 = arith.constant 0 : index
    %558 = vector.load %arg7[%c0_123, %c0_124] : memref<2x32xf32, #tpu.memory_space<vmem>>, vector<2x32xf32>
    tpu.vector_store %arg7[%c0_123, %c0_124], %557 {strides = array<i32>} : memref<2x32xf32, #tpu.memory_space<vmem>>, vector<2x32xf32>,
    return
  }
  func.func @transform_0(%arg0: i32) -> (i32, i32, i32) {
    %c0_i32 = arith.constant 0 : i32
    %c0_i32_0 = arith.constant 0 : i32
    %c0_i32_1 = arith.constant 0 : i32
    return %c0_i32, %arg0, %c0_i32_0 : i32, i32, i32
  }
  func.func @transform_1(%arg0: i32) -> (i32, i32) {
    %c0_i32 = arith.constant 0 : i32
    %c0_i32_0 = arith.constant 0 : i32
    %c0_i32_1 = arith.constant 0 : i32
    return %c0_i32, %c0_i32_0 : i32, i32
  }
  func.func @transform_2(%arg0: i32) -> (i32, i32) {
    %c0_i32 = arith.constant 0 : i32
    %c0_i32_0 = arith.constant 0 : i32
    %c0_i32_1 = arith.constant 0 : i32
    return %c0_i32, %c0_i32_0 : i32, i32
  }
  func.func @transform_3(%arg0: i32) -> (i32, i32) {
    %c0_i32 = arith.constant 0 : i32
    %c0_i32_0 = arith.constant 0 : i32
    %c0_i32_1 = arith.constant 0 : i32
    return %c0_i32, %c0_i32_0 : i32, i32
  }
  func.func @transform_4(%arg0: i32) -> (i32, i32) {
    %c0_i32 = arith.constant 0 : i32
    %c0_i32_0 = arith.constant 0 : i32
    %c0_i32_1 = arith.constant 0 : i32
    return %c0_i32, %c0_i32_0 : i32, i32
  }
  func.func @transform_5(%arg0: i32) -> (i32, i32) {
    %c0_i32 = arith.constant 0 : i32
    %c0_i32_0 = arith.constant 0 : i32
    %c0_i32_1 = arith.constant 0 : i32
    return %c0_i32, %c0_i32_0 : i32, i32
  }
  func.func @transform_6(%arg0: i32) -> (i32, i32) {
    %c0_i32 = arith.constant 0 : i32
    %c0_i32_0 = arith.constant 0 : i32
    return %arg0, %c0_i32 : i32, i32
  }
}

</mosaic_0001>

<llo_original>
// kernel: tpu_custom_call.1
$region0: #{tpu_custom_call.1}
  #allocation0 [shape = 'u32[]', space=smem, size = 0x4, offset = 0x4, fixed_abs, tag = 'smem constant byte address 0x4 - core index']
  #allocation1 [shape = 'u32[144,128]{1,0:T(1,128)}', space=vmem, size = 0x12000, scoped, tag = 'internal scratch']
  #allocation2 [shape = 'f32[8,2,96]{2,1,0:T(2,128)}', space=vmem, size = 0x2000, scoped, tag = 'scratch operand']
  %s0 = inlined_call_operand.vmem [shape: f32[8,2,4], index: 0, kind: input, shape index: {}]
  %s1 = inlined_call_operand.hbm [shape: f32[4,96], index: 1, kind: input, shape index: {}]
  %s2 = inlined_call_operand.vmem [shape: f32[16,48], index: 2, kind: input, shape index: {}]
  %s3 = inlined_call_operand.vmem [shape: f32[16,48], index: 3, kind: input, shape index: {}]
  %s4 = inlined_call_operand.vmem [shape: f32[1,96], index: 4, kind: input, shape index: {}]
  %s5 = inlined_call_operand.vmem [shape: f32[1,32], index: 5, kind: input, shape index: {}]
  %s6 = inlined_call_operand.hbm [shape: f32[2,32], index: 6, kind: output, shape index: {}]
  %s7 = sld [smem:[#allocation0]]
  $region38: #{tpu_custom_call.1} parent=0
    _
  %s9 = ssub.s32 1, %s7
  %s10 = scalar_select 0, %s9, %s7
  $region1: #{tpu_custom_call.1} parent=0
    #allocation3 [shape = 'u8[2048]{0}', space=vmem, size = 0x800, scoped, tag = 'input window, operand 1, single buffered']
    #allocation4 [shape = 's32[1]{0}', space=sflag, size = 0x4, scoped, tag = 'scoped memory for tpu_custom_call.1']
    #allocation5 [shape = 's32[1]{0}', space=sflag, size = 0x4, scoped, tag = 'scoped memory for tpu_custom_call.1']
    #allocation6 [shape = 'u8[1024]{0}', space=vmem, size = 0x400, scoped, tag = 'output window, operand 0, single buffered']
    %11 = vsyncpa [#allocation4], 0
    %12 = vsyncpa [#allocation5], 0
    // Predicated region
    $region2: #{tpu_custom_call.1} parent=1 // pred_check
      _
    $region3: #{tpu_custom_call.1} parent=1 // pred_check_branch
      %14 = sbr.rel (0) target = $region5
    $region4: #{tpu_custom_call.1} parent=1 // pred_region
      _
    $region5: #{tpu_custom_call.1} parent=1 // pred_fallthru
      _
    // Predicated region
    $region6: #{tpu_custom_call.1} parent=1 // pred_check
      _
    $region7: #{tpu_custom_call.1} parent=1 // pred_check_branch
      %16 = sbr.rel (0) target = $region9
    $region8: #{tpu_custom_call.1} parent=1 // pred_region
      %s18 = ssub.s32 64, 64
      %19 = vsyncadd [#allocation4], %s18
      %s21 = sshll.u32 [#allocation3], 4
      %s22 = int_to_ptr.vmem [resolvable:$true] %s21
      %24 = dma.hbm_to_vmem [thread:$0]  %s1, 64, %s22, [#allocation4]
    $region9: #{tpu_custom_call.1} parent=1 // pred_fallthru
      _
    // Predicated region
    $region10: #{tpu_custom_call.1} parent=1 // pred_check
      _
    $region11: #{tpu_custom_call.1} parent=1 // pred_check_branch
      %26 = sbr.rel (0) target = $region13
    $region12: #{tpu_custom_call.1} parent=1 // pred_region
      _
    $region13: #{tpu_custom_call.1} parent=1 // pred_fallthru
      _
    // Predicated region
    $region14: #{tpu_custom_call.1} parent=1 // pred_check
      _
    $region15: #{tpu_custom_call.1} parent=1 // pred_check_branch
      %28 = sbr.rel (0) target = $region17
    $region16: #{tpu_custom_call.1} parent=1 // pred_region
      _
    $region17: #{tpu_custom_call.1} parent=1 // pred_fallthru
      _
    // Predicated region
    $region18: #{tpu_custom_call.1} parent=1 // pred_check
      _
    $region19: #{tpu_custom_call.1} parent=1 // pred_check_branch
      %30 = sbr.rel (0) target = $region21
    $region20: #{tpu_custom_call.1} parent=1 // pred_region
      _
    $region21: #{tpu_custom_call.1} parent=1 // pred_fallthru
      _
    // Predicated region
    $region22: #{tpu_custom_call.1} parent=1 // pred_check
      _
    $region23: #{tpu_custom_call.1} parent=1 // pred_check_branch
      %32 = sbr.rel (0) target = $region25
    $region24: #{tpu_custom_call.1} parent=1 // pred_region
      _
    $region25: #{tpu_custom_call.1} parent=1 // pred_fallthru
      _
    // Predicated region
    $region26: #{tpu_custom_call.1} parent=1 // pred_check
      _
    $region27: #{tpu_custom_call.1} parent=1 // pred_check_branch
      %34 = sbr.rel (0) target = $region29
    $region28: #{tpu_custom_call.1} parent=1 // pred_region
      %35 = dma.done [#allocation4], 64
    $region29: #{tpu_custom_call.1} parent=1 // pred_fallthru
      _
    %v36 = vld [vmem:[%s0] sm:$0x3]
    %v37 = vld [vmem:[%s0 + $0x2] sm:$0x3]
    %v38 = vld [vmem:[%s0 + $0x4] sm:$0x3]
    %v39 = vld [vmem:[%s0 + $0x6] sm:$0x3]
    %v40 = vld [vmem:[%s0 + $0x8] sm:$0x3]
    %v41 = vld [vmem:[%s0 + $0xa] sm:$0x3]
    %v42 = vld [vmem:[%s0 + $0xc] sm:$0x3]
    %v43 = vld [vmem:[%s0 + $0xe] sm:$0x3]
    %v44 = vld [vmem:[#allocation3] sm:$0xf]
    %v45 = vld [vmem:[%s4] sm:$0x1]
    %v47 = vlaneseq
    %v48 = vshrl.u32 %v47, 7
    %v49 = vsub.s32 0, %v48
    %v50 = vrot.slane %v45, %v49
    %v60 = vcombine.low %v36, %v37
    %v61 = vcombine.low %v38, %v39
    %v63 = vunpack.c.l.s4 1983009808
    %v64 = vunpack.c.0.s8 %v63
    %v65 = vlaneseq
    %v66 = vshrl.u32 %v65, 7
    %v67 = vsub.s32 %v64, %v66
    %v68 = vrot.slane %v60, %v67
    %v70 = vunpack.c.l.s4 1983009808
    %v71 = vunpack.c.0.s8 %v70
    %v72 = vlaneseq
    %v73 = vshrl.u32 %v72, 7
    %v74 = vsub.s32 %v71, %v73
    %v75 = vrot.slane %v61, %v74
    %v76 = vcombine.low %v68, %v75
    %v77 = vcombine.low %v40, %v41
    %v78 = vcombine.low %v42, %v43
    %v80 = vunpack.c.l.s4 1983009808
    %v81 = vunpack.c.0.s8 %v80
    %v82 = vlaneseq
    %v83 = vshrl.u32 %v82, 7
    %v84 = vsub.s32 %v81, %v83
    %v85 = vrot.slane %v77, %v84
    %v87 = vunpack.c.l.s4 1983009808
    %v88 = vunpack.c.0.s8 %v87
    %v89 = vlaneseq
    %v90 = vshrl.u32 %v89, 7
    %v91 = vsub.s32 %v88, %v90
    %v92 = vrot.slane %v78, %v91
    %v93 = vcombine.low %v85, %v92
    %vm94 = vcmask 31744
    %v95 = vsel %vm94, %v76, 0
    %v97 = vsel %vm94, %v93, 0
    %vm99 = vcmask 1043456
    %v101 = vsel %vm99, %v44, 0
    %103 = vmatprep.subr.mxu0 0.0
    %104 = vmatpush1.msra.mxu0 %v101
    %105 = vmatprep.subr.mxu0 0.0
    %106 = vmatpush1.msra.mxu0 0.0
    %107 = vmatprep.subr.mxu0 0.0
    %108 = vmatpush1.msra.mxu0 0.0
    %109 = vmatprep.subr.mxu0 0.0
    %110 = vmatpush1.msra.mxu0 0.0
    %111 = vmatprep.subr.mxu0 0.0
    %112 = vmatpush1.msra.mxu0 0.0
    %113 = vmatprep.subr.mxu0 0.0
    %114 = vmatpush1.msra.mxu0 0.0
    %115 = vmatprep.subr.mxu0 0.0
    %116 = vmatpush1.msra.mxu0 0.0
    %117 = vmatprep.subr.mxu0 0.0
    %118 = vmatpush1.msra.mxu0 0.0
    %119 = vmatprep.subr.mxu0 0.0
    %120 = vmatpush1.msra.mxu0 0.0
    %121 = vmatprep.subr.mxu0 0.0
    %122 = vmatpush1.msra.mxu0 0.0
    %123 = vmatprep.subr.mxu0 0.0
    %124 = vmatpush1.msra.mxu0 0.0
    %125 = vmatprep.subr.mxu0 0.0
    %126 = vmatpush1.msra.mxu0 0.0
    %127 = vmatprep.subr.mxu0 0.0
    %128 = vmatpush1.msra.mxu0 0.0
    %129 = vmatprep.subr.mxu0 0.0
    %130 = vmatpush1.msra.mxu0 0.0
    %131 = vmatprep.subr.mxu0 0.0
    %132 = vmatpush1.msra.mxu0 0.0
    %133 = vmatprep.subr.mxu0 0.0
    %134 = vmatpush1.msra.mxu0 0.0
    %135 = vmatprep.subr.mxu0 0.0
    %136 = vmatpush1.msra.mxu0 0.0
    %137 = vmatprep.subr.mxu0 0.0
    %138 = vmatpush1.msra.mxu0 0.0
    %139 = vmatprep.subr.mxu0 0.0
    %140 = vmatpush1.msra.mxu0 0.0
    %141 = vmatprep.subr.mxu0 0.0
    %142 = vmatpush1.msra.mxu0 0.0
    %143 = vmatprep.subr.mxu0 0.0
    %144 = vmatpush1.msra.mxu0 0.0
    %145 = vmatprep.subr.mxu0 0.0
    %146 = vmatpush1.msra.mxu0 0.0
    %147 = vmatprep.subr.mxu0 0.0
    %148 = vmatpush1.msra.mxu0 0.0
    %149 = vmatprep.subr.mxu0 0.0
    %150 = vmatpush1.msra.mxu0 0.0
    %151 = vmatprep.subr.mxu0 0.0
    %152 = vmatpush1.msra.mxu0 0.0
    %153 = vmatprep.subr.mxu0 0.0
    %154 = vmatpush1.msra.mxu0 0.0
    %155 = vmatprep.subr.mxu0 0.0
    %156 = vmatpush1.msra.mxu0 0.0
    %157 = vmatprep.subr.mxu0 0.0
    %158 = vmatpush1.msra.mxu0 0.0
    %159 = vmatprep.subr.mxu0 0.0
    %160 = vmatpush1.msra.mxu0 0.0
    %161 = vmatprep.subr.mxu0 0.0
    %162 = vmatpush1.msra.mxu0 0.0
    %163 = vmatprep.subr.mxu0 0.0
    %164 = vmatpush1.msra.mxu0 0.0
    %165 = vmatprep.subr.mxu0 0.0
    %166 = vmatpush1.msra.mxu0 0.0
    %167 = vmatprep.mubr.f32.mxu0 0.0
    %168 = vmatmul.mubr.f32.gmra.mrb[0].mxu0 %v95
    %v169 = vpop.f32.mrb[0].mxu0
    %v170 = vadd.f32 %v50, %v169
    %v171 = vpop.f32.mrb[0].mxu0
    %172 = vmatprep.mubr.f32.mxu0 0.0
    %173 = vmatmul.mubr.f32.gmra.mrb[0].mxu0 %v97
    %v174 = vpop.f32.mrb[0].mxu0
    %v175 = vadd.f32 %v50, %v174
    %v176 = vpop.f32.mrb[0].mxu0
    %177 = vdwg.mxu0
    %v180 = vcombine.high %v170, %v170
    %v182 = vunpack.c.l.s4 1983009808
    %v183 = vunpack.c.0.s8 %v182
    %v184 = vlaneseq
    %v185 = vshrl.u32 %v184, 7
    %v186 = vsub.s32 %v183, %v185
    %v187 = vrot.slane %v170, %v186
    %v189 = vunpack.c.l.s4 1983009808
    %v190 = vunpack.c.0.s8 %v189
    %v191 = vlaneseq
    %v192 = vshrl.u32 %v191, 7
    %v193 = vsub.s32 %v190, %v192
    %v194 = vrot.slane %v180, %v193
    %v195 = vcombine.high %v187, %v187
    %v196 = vcombine.high %v194, %v194
    %v197 = vcombine.high %v175, %v175
    %v199 = vunpack.c.l.s4 1983009808
    %v200 = vunpack.c.0.s8 %v199
    %v201 = vlaneseq
    %v202 = vshrl.u32 %v201, 7
    %v203 = vsub.s32 %v200, %v202
    %v204 = vrot.slane %v175, %v203
    %v206 = vunpack.c.l.s4 1983009808
    %v207 = vunpack.c.0.s8 %v206
    %v208 = vlaneseq
    %v209 = vshrl.u32 %v208, 7
    %v210 = vsub.s32 %v207, %v209
    %v211 = vrot.slane %v197, %v210
    %v212 = vcombine.high %v204, %v204
    %v213 = vcombine.high %v211, %v211
    %vm222 = vcmask 779264
    %223 = vst.msk [vmem:[#allocation2] sm:$0x3] %vm222, %v187
    %224 = vst.msk [vmem:[#allocation2 + $0x2] sm:$0x3] %vm222, %v195
    %225 = vst.msk [vmem:[#allocation2 + $0x4] sm:$0x3] %vm222, %v194
    %226 = vst.msk [vmem:[#allocation2 + $0x6] sm:$0x3] %vm222, %v196
    %227 = vst.msk [vmem:[#allocation2 + $0x8] sm:$0x3] %vm222, %v204
    %228 = vst.msk [vmem:[#allocation2 + $0xa] sm:$0x3] %vm222, %v212
    %229 = vst.msk [vmem:[#allocation2 + $0xc] sm:$0x3] %vm222, %v211
    %230 = vst.msk [vmem:[#allocation2 + $0xe] sm:$0x3] %vm222, %v213
    %v231 = vld [vmem:[%s2] sm:$0xff]
    %v232 = vld [vmem:[%s2 + $0x8] sm:$0xff]
    %v233 = vld [vmem:[%s3] sm:$0xff]
    %v234 = vld [vmem:[%s3 + $0x8] sm:$0xff]
    %v235 = vld [vmem:[%s5] sm:$0x1]
    %v237 = vlaneseq
    %v238 = vshrl.u32 %v237, 7
    %v239 = vsub.s32 0, %v238
    %v240 = vrot.slane %v235, %v239
    %v241 = vld [vmem:[#allocation2] sm:$0x3]
    %s242 = scalar_lea.vmem [#allocation2], 14
    %v243 = vld [vmem:[%s242] sm:$0x3]
    %vm244 = vcmask 130048
    %v246 = vsel %vm244, 0.0, 0
    %248 = vmatprep.subr.mxu0 0.0
    %249 = vmatpush1.msra.mxu0 %v231
    %250 = vmatprep.subr.mxu0 0.0
    %251 = vmatpush1.msra.mxu0 %v232
    %252 = vmatprep.subr.mxu0 0.0
    %253 = vmatpush1.msra.mxu0 0.0
    %254 = vmatprep.subr.mxu0 0.0
    %255 = vmatpush1.msra.mxu0 0.0
    %256 = vmatprep.subr.mxu0 0.0
    %257 = vmatpush1.msra.mxu0 0.0
    %258 = vmatprep.subr.mxu0 0.0
    %259 = vmatpush1.msra.mxu0 0.0
    %260 = vmatprep.subr.mxu0 0.0
    %261 = vmatpush1.msra.mxu0 0.0
    %262 = vmatprep.subr.mxu0 0.0
    %263 = vmatpush1.msra.mxu0 0.0
    %264 = vmatprep.subr.mxu0 0.0
    %265 = vmatpush1.msra.mxu0 0.0
    %266 = vmatprep.subr.mxu0 0.0
    %267 = vmatpush1.msra.mxu0 0.0
    %268 = vmatprep.subr.mxu0 0.0
    %269 = vmatpush1.msra.mxu0 0.0
    %270 = vmatprep.subr.mxu0 0.0
    %271 = vmatpush1.msra.mxu0 0.0
    %272 = vmatprep.subr.mxu0 0.0
    %273 = vmatpush1.msra.mxu0 0.0
    %274 = vmatprep.subr.mxu0 0.0
    %275 = vmatpush1.msra.mxu0 0.0
    %276 = vmatprep.subr.mxu0 0.0
    %277 = vmatpush1.msra.mxu0 0.0
    %278 = vmatprep.subr.mxu0 0.0
    %279 = vmatpush1.msra.mxu0 0.0
    %280 = vmatprep.subr.mxu0 0.0
    %281 = vmatpush1.msra.mxu0 0.0
    %282 = vmatprep.subr.mxu0 0.0
    %283 = vmatpush1.msra.mxu0 0.0
    %284 = vmatprep.subr.mxu0 0.0
    %285 = vmatpush1.msra.mxu0 0.0
    %286 = vmatprep.subr.mxu0 0.0
    %287 = vmatpush1.msra.mxu0 0.0
    %288 = vmatprep.subr.mxu0 0.0
    %289 = vmatpush1.msra.mxu0 0.0
    %290 = vmatprep.subr.mxu0 0.0
    %291 = vmatpush1.msra.mxu0 0.0
    %292 = vmatprep.subr.mxu0 0.0
    %293 = vmatpush1.msra.mxu0 0.0
    %294 = vmatprep.subr.mxu0 0.0
    %295 = vmatpush1.msra.mxu0 0.0
    %296 = vmatprep.subr.mxu0 0.0
    %297 = vmatpush1.msra.mxu0 0.0
    %298 = vmatprep.subr.mxu0 0.0
    %299 = vmatpush1.msra.mxu0 0.0
    %300 = vmatprep.subr.mxu0 0.0
    %301 = vmatpush1.msra.mxu0 0.0
    %302 = vmatprep.subr.mxu0 0.0
    %303 = vmatpush1.msra.mxu0 0.0
    %304 = vmatprep.subr.mxu0 0.0
    %305 = vmatpush1.msra.mxu0 0.0
    %306 = vmatprep.subr.mxu0 0.0
    %307 = vmatpush1.msra.mxu0 0.0
    %308 = vmatprep.subr.mxu0 0.0
    %309 = vmatpush1.msra.mxu0 0.0
    %310 = vmatprep.subr.mxu0 0.0
    %311 = vmatpush1.msra.mxu0 0.0
    %312 = vmatprep.mubr.f32.mxu0 0.0
    %313 = vmatmul.mubr.f32.gmra.mrb[0].mxu0 %v246
    %v314 = vpop.f32.mrb[0].mxu0
    %v315 = vadd.f32 0.0, %v314
    %v316 = vpop.f32.mrb[0].mxu0
    %317 = vdwg.mxu0
    %318 = vmatprep.subr.mxu0 0.0
    %319 = vmatpush1.msra.mxu0 %v233
    %320 = vmatprep.subr.mxu0 0.0
    %321 = vmatpush1.msra.mxu0 %v234
    %322 = vmatprep.subr.mxu0 0.0
    %323 = vmatpush1.msra.mxu0 0.0
    %324 = vmatprep.subr.mxu0 0.0
    %325 = vmatpush1.msra.mxu0 0.0
    %326 = vmatprep.subr.mxu0 0.0
    %327 = vmatpush1.msra.mxu0 0.0
    %328 = vmatprep.subr.mxu0 0.0
    %329 = vmatpush1.msra.mxu0 0.0
    %330 = vmatprep.subr.mxu0 0.0
    %331 = vmatpush1.msra.mxu0 0.0
    %332 = vmatprep.subr.mxu0 0.0
    %333 = vmatpush1.msra.mxu0 0.0
    %334 = vmatprep.subr.mxu0 0.0
    %335 = vmatpush1.msra.mxu0 0.0
    %336 = vmatprep.subr.mxu0 0.0
    %337 = vmatpush1.msra.mxu0 0.0
    %338 = vmatprep.subr.mxu0 0.0
    %339 = vmatpush1.msra.mxu0 0.0
    %340 = vmatprep.subr.mxu0 0.0
    %341 = vmatpush1.msra.mxu0 0.0
    %342 = vmatprep.subr.mxu0 0.0
    %343 = vmatpush1.msra.mxu0 0.0
    %344 = vmatprep.subr.mxu0 0.0
    %345 = vmatpush1.msra.mxu0 0.0
    %346 = vmatprep.subr.mxu0 0.0
    %347 = vmatpush1.msra.mxu0 0.0
    %348 = vmatprep.subr.mxu0 0.0
    %349 = vmatpush1.msra.mxu0 0.0
    %350 = vmatprep.subr.mxu0 0.0
    %351 = vmatpush1.msra.mxu0 0.0
    %352 = vmatprep.subr.mxu0 0.0
    %353 = vmatpush1.msra.mxu0 0.0
    %354 = vmatprep.subr.mxu0 0.0
    %355 = vmatpush1.msra.mxu0 0.0
    %356 = vmatprep.subr.mxu0 0.0
    %357 = vmatpush1.msra.mxu0 0.0
    %358 = vmatprep.subr.mxu0 0.0
    %359 = vmatpush1.msra.mxu0 0.0
    %360 = vmatprep.subr.mxu0 0.0
    %361 = vmatpush1.msra.mxu0 0.0
    %362 = vmatprep.subr.mxu0 0.0
    %363 = vmatpush1.msra.mxu0 0.0
    %364 = vmatprep.subr.mxu0 0.0
    %365 = vmatpush1.msra.mxu0 0.0
    %366 = vmatprep.subr.mxu0 0.0
    %367 = vmatpush1.msra.mxu0 0.0
    %368 = vmatprep.subr.mxu0 0.0
    %369 = vmatpush1.msra.mxu0 0.0
    %370 = vmatprep.subr.mxu0 0.0
    %371 = vmatpush1.msra.mxu0 0.0
    %372 = vmatprep.subr.mxu0 0.0
    %373 = vmatpush1.msra.mxu0 0.0
    %374 = vmatprep.subr.mxu0 0.0
    %375 = vmatpush1.msra.mxu0 0.0
    %376 = vmatprep.subr.mxu0 0.0
    %377 = vmatpush1.msra.mxu0 0.0
    %378 = vmatprep.subr.mxu0 0.0
    %379 = vmatpush1.msra.mxu0 0.0
    %380 = vmatprep.subr.mxu0 0.0
    %381 = vmatpush1.msra.mxu0 0.0
    %382 = vmatprep.mubr.f32.mxu0 0.0
    %383 = vmatmul.mubr.f32.gmra.mrb[0].mxu0 %v246
    %v384 = vpop.f32.mrb[0].mxu0
    %v385 = vadd.f32 0.0, %v384
    %v386 = vpop.f32.mrb[0].mxu0
    %387 = vdwg.mxu0
    %v388 = vadd.f32 %v241, %v315
    %v389 = vxor.u32 %v388, 2147483648
    %v390 = vmul.f32 %v389, 1.442695
    %v391 = vpow.pop %v390
    %v392 = vadd.f32 %v391, 1.0
    %v393 = vrcp.pop %v392
    %v394 = vmul.f32 1.0, %v393
    %395 = vrot.lane.b32.xlu0 %v240, 32
    %v396 = vpop.permute.xlu0 %395
    %v398 = vadd.f32 %v315, %v396
    %400 = vrot.lane.b32.xlu0 %v398, 96
    %v401 = vpop.permute.xlu0 %400
    %v403 = vmul.f32 %v394, %v401
    %405 = vrot.lane.b32.xlu0 %v403, 32
    %v406 = vpop.permute.xlu0 %405
    %v408 = vadd.f32 %v241, %v406
    %v409 = vtanh.pop %v408
    %v410 = vsub.f32 1.0, %v394
    %412 = vrot.lane.b32.xlu0 %v409, 112
    %v413 = vpop.permute.xlu0 %412
    %v415 = vmul.f32 %v410, %v413
    %v416 = vmul.f32 %v394, 0.0
    %v417 = vadd.f32 %v415, %v416
    %419 = vrot.lane.b32.xlu0 %v385, 48
    %v420 = vpop.permute.xlu0 %419
    %v422 = vadd.f32 %v243, %v420
    %v423 = vxor.u32 %v422, 2147483648
    %v424 = vmul.f32 %v423, 1.442695
    %v425 = vpow.pop %v424
    %v426 = vadd.f32 %v425, 1.0
    %v427 = vrcp.pop %v426
    %v428 = vmul.f32 1.0, %v427
    %429 = vrot.lane.b32.xlu0 %v240, 16
    %v430 = vpop.permute.xlu0 %429
    %v432 = vadd.f32 %v385, %v430
    %434 = vrot.lane.b32.xlu0 %v432, 16
    %v435 = vpop.permute.xlu0 %434
    %v437 = vmul.f32 %v428, %v435
    %439 = vrot.lane.b32.xlu0 %v437, 32
    %v440 = vpop.permute.xlu0 %439
    %v442 = vadd.f32 %v243, %v440
    %v443 = vtanh.pop %v442
    %v444 = vsub.f32 1.0, %v428
    %446 = vrot.lane.b32.xlu0 %v443, 112
    %v447 = vpop.permute.xlu0 %446
    %v449 = vmul.f32 %v444, %v447
    %v450 = vmul.f32 %v428, 0.0
    %v451 = vadd.f32 %v449, %v450
    %v452 = vadd.f32 %v417, 0.0
    %v453 = vadd.f32 %v451, 0.0
    %s454 = scalar_lea.vmem [#allocation2], 2
    %v455 = vld [vmem:[%s454] sm:$0x3]
    %s456 = scalar_lea.vmem [#allocation2], 12
    %v457 = vld [vmem:[%s456] sm:$0x3]
    %459 = vrot.lane.b32.xlu0 %v417, 112
    %v460 = vpop.permute.xlu0 %459
    %v461 = vsel %vm244, %v460, 0
    %463 = vmatprep.subr.mxu0 0.0
    %464 = vmatpush1.msra.mxu0 %v231
    %465 = vmatprep.subr.mxu0 0.0
    %466 = vmatpush1.msra.mxu0 %v232
    %467 = vmatprep.subr.mxu0 0.0
    %468 = vmatpush1.msra.mxu0 0.0
    %469 = vmatprep.subr.mxu0 0.0
    %470 = vmatpush1.msra.mxu0 0.0
    %471 = vmatprep.subr.mxu0 0.0
    %472 = vmatpush1.msra.mxu0 0.0
    %473 = vmatprep.subr.mxu0 0.0
    %474 = vmatpush1.msra.mxu0 0.0
    %475 = vmatprep.subr.mxu0 0.0
    %476 = vmatpush1.msra.mxu0 0.0
    %477 = vmatprep.subr.mxu0 0.0
    %478 = vmatpush1.msra.mxu0 0.0
    %479 = vmatprep.subr.mxu0 0.0
    %480 = vmatpush1.msra.mxu0 0.0
    %481 = vmatprep.subr.mxu0 0.0
    %482 = vmatpush1.msra.mxu0 0.0
    %483 = vmatprep.subr.mxu0 0.0
    %484 = vmatpush1.msra.mxu0 0.0
    %485 = vmatprep.subr.mxu0 0.0
    %486 = vmatpush1.msra.mxu0 0.0
    %487 = vmatprep.subr.mxu0 0.0
    %488 = vmatpush1.msra.mxu0 0.0
    %489 = vmatprep.subr.mxu0 0.0
    %490 = vmatpush1.msra.mxu0 0.0
    %491 = vmatprep.subr.mxu0 0.0
    %492 = vmatpush1.msra.mxu0 0.0
    %493 = vmatprep.subr.mxu0 0.0
    %494 = vmatpush1.msra.mxu0 0.0
    %495 = vmatprep.subr.mxu0 0.0
    %496 = vmatpush1.msra.mxu0 0.0
    %497 = vmatprep.subr.mxu0 0.0
    %498 = vmatpush1.msra.mxu0 0.0
    %499 = vmatprep.subr.mxu0 0.0
    %500 = vmatpush1.msra.mxu0 0.0
    %501 = vmatprep.subr.mxu0 0.0
    %502 = vmatpush1.msra.mxu0 0.0
    %503 = vmatprep.subr.mxu0 0.0
    %504 = vmatpush1.msra.mxu0 0.0
    %505 = vmatprep.subr.mxu0 0.0
    %506 = vmatpush1.msra.mxu0 0.0
    %507 = vmatprep.subr.mxu0 0.0
    %508 = vmatpush1.msra.mxu0 0.0
    %509 = vmatprep.subr.mxu0 0.0
    %510 = vmatpush1.msra.mxu0 0.0
    %511 = vmatprep.subr.mxu0 0.0
    %512 = vmatpush1.msra.mxu0 0.0
    %513 = vmatprep.subr.mxu0 0.0
    %514 = vmatpush1.msra.mxu0 0.0
    %515 = vmatprep.subr.mxu0 0.0
    %516 = vmatpush1.msra.mxu0 0.0
    %517 = vmatprep.subr.mxu0 0.0
    %518 = vmatpush1.msra.mxu0 0.0
    %519 = vmatprep.subr.mxu0 0.0
    %520 = vmatpush1.msra.mxu0 0.0
    %521 = vmatprep.subr.mxu0 0.0
    %522 = vmatpush1.msra.mxu0 0.0
    %523 = vmatprep.subr.mxu0 0.0
    %524 = vmatpush1.msra.mxu0 0.0
    %525 = vmatprep.subr.mxu0 0.0
    %526 = vmatpush1.msra.mxu0 0.0
    %527 = vmatprep.mubr.f32.mxu0 0.0
    %528 = vmatmul.mubr.f32.gmra.mrb[0].mxu0 %v461
    %v529 = vpop.f32.mrb[0].mxu0
    %v530 = vadd.f32 0.0, %v529
    %v531 = vpop.f32.mrb[0].mxu0
    %532 = vdwg.mxu0
    %534 = vrot.lane.b32.xlu0 %v451, 64
    %v535 = vpop.permute.xlu0 %534
    %v536 = vsel %vm244, %v535, 0
    %538 = vmatprep.subr.mxu0 0.0
    %539 = vmatpush1.msra.mxu0 %v233
    %540 = vmatprep.subr.mxu0 0.0
    %541 = vmatpush1.msra.mxu0 %v234
    %542 = vmatprep.subr.mxu0 0.0
    %543 = vmatpush1.msra.mxu0 0.0
    %544 = vmatprep.subr.mxu0 0.0
    %545 = vmatpush1.msra.mxu0 0.0
    %546 = vmatprep.subr.mxu0 0.0
    %547 = vmatpush1.msra.mxu0 0.0
    %548 = vmatprep.subr.mxu0 0.0
    %549 = vmatpush1.msra.mxu0 0.0
    %550 = vmatprep.subr.mxu0 0.0
    %551 = vmatpush1.msra.mxu0 0.0
    %552 = vmatprep.subr.mxu0 0.0
    %553 = vmatpush1.msra.mxu0 0.0
    %554 = vmatprep.subr.mxu0 0.0
    %555 = vmatpush1.msra.mxu0 0.0
    %556 = vmatprep.subr.mxu0 0.0
    %557 = vmatpush1.msra.mxu0 0.0
    %558 = vmatprep.subr.mxu0 0.0
    %559 = vmatpush1.msra.mxu0 0.0
    %560 = vmatprep.subr.mxu0 0.0
    %561 = vmatpush1.msra.mxu0 0.0
    %562 = vmatprep.subr.mxu0 0.0
    %563 = vmatpush1.msra.mxu0 0.0
    %564 = vmatprep.subr.mxu0 0.0
    %565 = vmatpush1.msra.mxu0 0.0
    %566 = vmatprep.subr.mxu0 0.0
    %567 = vmatpush1.msra.mxu0 0.0
    %568 = vmatprep.subr.mxu0 0.0
    %569 = vmatpush1.msra.mxu0 0.0
    %570 = vmatprep.subr.mxu0 0.0
    %571 = vmatpush1.msra.mxu0 0.0
    %572 = vmatprep.subr.mxu0 0.0
    %573 = vmatpush1.msra.mxu0 0.0
    %574 = vmatprep.subr.mxu0 0.0
    %575 = vmatpush1.msra.mxu0 0.0
    %576 = vmatprep.subr.mxu0 0.0
    %577 = vmatpush1.msra.mxu0 0.0
    %578 = vmatprep.subr.mxu0 0.0
    %579 = vmatpush1.msra.mxu0 0.0
    %580 = vmatprep.subr.mxu0 0.0
    %581 = vmatpush1.msra.mxu0 0.0
    %582 = vmatprep.subr.mxu0 0.0
    %583 = vmatpush1.msra.mxu0 0.0
    %584 = vmatprep.subr.mxu0 0.0
    %585 = vmatpush1.msra.mxu0 0.0
    %586 = vmatprep.subr.mxu0 0.0
    %587 = vmatpush1.msra.mxu0 0.0
    %588 = vmatprep.subr.mxu0 0.0
    %589 = vmatpush1.msra.mxu0 0.0
    %590 = vmatprep.subr.mxu0 0.0
    %591 = vmatpush1.msra.mxu0 0.0
    %592 = vmatprep.subr.mxu0 0.0
    %593 = vmatpush1.msra.mxu0 0.0
    %594 = vmatprep.subr.mxu0 0.0
    %595 = vmatpush1.msra.mxu0 0.0
    %596 = vmatprep.subr.mxu0 0.0
    %597 = vmatpush1.msra.mxu0 0.0
    %598 = vmatprep.subr.mxu0 0.0
    %599 = vmatpush1.msra.mxu0 0.0
    %600 = vmatprep.subr.mxu0 0.0
    %601 = vmatpush1.msra.mxu0 0.0
    %602 = vmatprep.mubr.f32.mxu0 0.0
    %603 = vmatmul.mubr.f32.gmra.mrb[0].mxu0 %v536
    %v604 = vpop.f32.mrb[0].mxu0
    %v605 = vadd.f32 0.0, %v604
    %v606 = vpop.f32.mrb[0].mxu0
    %607 = vdwg.mxu0
    %v608 = vadd.f32 %v455, %v530
    %v609 = vxor.u32 %v608, 2147483648
    %v610 = vmul.f32 %v609, 1.442695
    %v611 = vpow.pop %v610
    %v612 = vadd.f32 %v611, 1.0
    %v613 = vrcp.pop %v612
    %v614 = vmul.f32 1.0, %v613
    %v615 = vadd.f32 %v530, %v396
    %617 = vrot.lane.b32.xlu0 %v615, 96
    %v618 = vpop.permute.xlu0 %617
    %v620 = vmul.f32 %v614, %v618
    %622 = vrot.lane.b32.xlu0 %v620, 32
    %v623 = vpop.permute.xlu0 %622
    %v625 = vadd.f32 %v455, %v623
    %v626 = vtanh.pop %v625
    %v627 = vsub.f32 1.0, %v614
    %629 = vrot.lane.b32.xlu0 %v626, 112
    %v630 = vpop.permute.xlu0 %629
    %v632 = vmul.f32 %v627, %v630
    %v633 = vmul.f32 %v614, %v417
    %v634 = vadd.f32 %v632, %v633
    %636 = vrot.lane.b32.xlu0 %v605, 48
    %v637 = vpop.permute.xlu0 %636
    %v639 = vadd.f32 %v457, %v637
    %v640 = vxor.u32 %v639, 2147483648
    %v641 = vmul.f32 %v640, 1.442695
    %v642 = vpow.pop %v641
    %v643 = vadd.f32 %v642, 1.0
    %v644 = vrcp.pop %v643
    %v645 = vmul.f32 1.0, %v644
    %v646 = vadd.f32 %v605, %v430
    %648 = vrot.lane.b32.xlu0 %v646, 16
    %v649 = vpop.permute.xlu0 %648
    %v651 = vmul.f32 %v645, %v649
    %653 = vrot.lane.b32.xlu0 %v651, 32
    %v654 = vpop.permute.xlu0 %653
    %v656 = vadd.f32 %v457, %v654
    %v657 = vtanh.pop %v656
    %v658 = vsub.f32 1.0, %v645
    %660 = vrot.lane.b32.xlu0 %v657, 112
    %v661 = vpop.permute.xlu0 %660
    %v663 = vmul.f32 %v658, %v661
    %v664 = vmul.f32 %v645, %v451
    %v665 = vadd.f32 %v663, %v664
    %v666 = vadd.f32 %v452, %v634
    %v667 = vadd.f32 %v453, %v665
    %s668 = scalar_lea.vmem [#allocation2], 4
    %v669 = vld [vmem:[%s668] sm:$0x3]
    %s670 = scalar_lea.vmem [#allocation2], 10
    %v671 = vld [vmem:[%s670] sm:$0x3]
    %673 = vrot.lane.b32.xlu0 %v634, 112
    %v674 = vpop.permute.xlu0 %673
    %v675 = vsel %vm244, %v674, 0
    %677 = vmatprep.subr.mxu0 0.0
    %678 = vmatpush1.msra.mxu0 %v231
    %679 = vmatprep.subr.mxu0 0.0
    %680 = vmatpush1.msra.mxu0 %v232
    %681 = vmatprep.subr.mxu0 0.0
    %682 = vmatpush1.msra.mxu0 0.0
    %683 = vmatprep.subr.mxu0 0.0
    %684 = vmatpush1.msra.mxu0 0.0
    %685 = vmatprep.subr.mxu0 0.0
    %686 = vmatpush1.msra.mxu0 0.0
    %687 = vmatprep.subr.mxu0 0.0
    %688 = vmatpush1.msra.mxu0 0.0
    %689 = vmatprep.subr.mxu0 0.0
    %690 = vmatpush1.msra.mxu0 0.0
    %691 = vmatprep.subr.mxu0 0.0
    %692 = vmatpush1.msra.mxu0 0.0
    %693 = vmatprep.subr.mxu0 0.0
    %694 = vmatpush1.msra.mxu0 0.0
    %695 = vmatprep.subr.mxu0 0.0
    %696 = vmatpush1.msra.mxu0 0.0
    %697 = vmatprep.subr.mxu0 0.0
    %698 = vmatpush1.msra.mxu0 0.0
    %699 = vmatprep.subr.mxu0 0.0
    %700 = vmatpush1.msra.mxu0 0.0
    %701 = vmatprep.subr.mxu0 0.0
    %702 = vmatpush1.msra.mxu0 0.0
    %703 = vmatprep.subr.mxu0 0.0
    %704 = vmatpush1.msra.mxu0 0.0
    %705 = vmatprep.subr.mxu0 0.0
    %706 = vmatpush1.msra.mxu0 0.0
    %707 = vmatprep.subr.mxu0 0.0
    %708 = vmatpush1.msra.mxu0 0.0
    %709 = vmatprep.subr.mxu0 0.0
    %710 = vmatpush1.msra.mxu0 0.0
    %711 = vmatprep.subr.mxu0 0.0
    %712 = vmatpush1.msra.mxu0 0.0
    %713 = vmatprep.subr.mxu0 0.0
    %714 = vmatpush1.msra.mxu0 0.0
    %715 = vmatprep.subr.mxu0 0.0
    %716 = vmatpush1.msra.mxu0 0.0
    %717 = vmatprep.subr.mxu0 0.0
    %718 = vmatpush1.msra.mxu0 0.0
    %719 = vmatprep.subr.mxu0 0.0
    %720 = vmatpush1.msra.mxu0 0.0
    %721 = vmatprep.subr.mxu0 0.0
    %722 = vmatpush1.msra.mxu0 0.0
    %723 = vmatprep.subr.mxu0 0.0
    %724 = vmatpush1.msra.mxu0 0.0
    %725 = vmatprep.subr.mxu0 0.0
    %726 = vmatpush1.msra.mxu0 0.0
    %727 = vmatprep.subr.mxu0 0.0
    %728 = vmatpush1.msra.mxu0 0.0
    %729 = vmatprep.subr.mxu0 0.0
    %730 = vmatpush1.msra.mxu0 0.0
    %731 = vmatprep.subr.mxu0 0.0
    %732 = vmatpush1.msra.mxu0 0.0
    %733 = vmatprep.subr.mxu0 0.0
    %734 = vmatpush1.msra.mxu0 0.0
    %735 = vmatprep.subr.mxu0 0.0
    %736 = vmatpush1.msra.mxu0 0.0
    %737 = vmatprep.subr.mxu0 0.0
    %738 = vmatpush1.msra.mxu0 0.0
    %739 = vmatprep.subr.mxu0 0.0
    %740 = vmatpush1.msra.mxu0 0.0
    %741 = vmatprep.mubr.f32.mxu0 0.0
    %742 = vmatmul.mubr.f32.gmra.mrb[0].mxu0 %v675
    %v743 = vpop.f32.mrb[0].mxu0
    %v744 = vadd.f32 0.0, %v743
    %v745 = vpop.f32.mrb[0].mxu0
    %746 = vdwg.mxu0
    %748 = vrot.lane.b32.xlu0 %v665, 64
    %v749 = vpop.permute.xlu0 %748
    %v750 = vsel %vm244, %v749, 0
    %752 = vmatprep.subr.mxu0 0.0
    %753 = vmatpush1.msra.mxu0 %v233
    %754 = vmatprep.subr.mxu0 0.0
    %755 = vmatpush1.msra.mxu0 %v234
    %756 = vmatprep.subr.mxu0 0.0
    %757 = vmatpush1.msra.mxu0 0.0
    %758 = vmatprep.subr.mxu0 0.0
    %759 = vmatpush1.msra.mxu0 0.0
    %760 = vmatprep.subr.mxu0 0.0
    %761 = vmatpush1.msra.mxu0 0.0
    %762 = vmatprep.subr.mxu0 0.0
    %763 = vmatpush1.msra.mxu0 0.0
    %764 = vmatprep.subr.mxu0 0.0
    %765 = vmatpush1.msra.mxu0 0.0
    %766 = vmatprep.subr.mxu0 0.0
    %767 = vmatpush1.msra.mxu0 0.0
    %768 = vmatprep.subr.mxu0 0.0
    %769 = vmatpush1.msra.mxu0 0.0
    %770 = vmatprep.subr.mxu0 0.0
    %771 = vmatpush1.msra.mxu0 0.0
    %772 = vmatprep.subr.mxu0 0.0
    %773 = vmatpush1.msra.mxu0 0.0
    %774 = vmatprep.subr.mxu0 0.0
    %775 = vmatpush1.msra.mxu0 0.0
    %776 = vmatprep.subr.mxu0 0.0
    %777 = vmatpush1.msra.mxu0 0.0
    %778 = vmatprep.subr.mxu0 0.0
    %779 = vmatpush1.msra.mxu0 0.0
    %780 = vmatprep.subr.mxu0 0.0
    %781 = vmatpush1.msra.mxu0 0.0
    %782 = vmatprep.subr.mxu0 0.0
    %783 = vmatpush1.msra.mxu0 0.0
    %784 = vmatprep.subr.mxu0 0.0
    %785 = vmatpush1.msra.mxu0 0.0
    %786 = vmatprep.subr.mxu0 0.0
    %787 = vmatpush1.msra.mxu0 0.0
    %788 = vmatprep.subr.mxu0 0.0
    %789 = vmatpush1.msra.mxu0 0.0
    %790 = vmatprep.subr.mxu0 0.0
    %791 = vmatpush1.msra.mxu0 0.0
    %792 = vmatprep.subr.mxu0 0.0
    %793 = vmatpush1.msra.mxu0 0.0
    %794 = vmatprep.subr.mxu0 0.0
    %795 = vmatpush1.msra.mxu0 0.0
    %796 = vmatprep.subr.mxu0 0.0
    %797 = vmatpush1.msra.mxu0 0.0
    %798 = vmatprep.subr.mxu0 0.0
    %799 = vmatpush1.msra.mxu0 0.0
    %800 = vmatprep.subr.mxu0 0.0
    %801 = vmatpush1.msra.mxu0 0.0
    %802 = vmatprep.subr.mxu0 0.0
    %803 = vmatpush1.msra.mxu0 0.0
    %804 = vmatprep.subr.mxu0 0.0
    %805 = vmatpush1.msra.mxu0 0.0
    %806 = vmatprep.subr.mxu0 0.0
    %807 = vmatpush1.msra.mxu0 0.0
    %808 = vmatprep.subr.mxu0 0.0
    %809 = vmatpush1.msra.mxu0 0.0
    %810 = vmatprep.subr.mxu0 0.0
    %811 = vmatpush1.msra.mxu0 0.0
    %812 = vmatprep.subr.mxu0 0.0
    %813 = vmatpush1.msra.mxu0 0.0
    %814 = vmatprep.subr.mxu0 0.0
    %815 = vmatpush1.msra.mxu0 0.0
    %816 = vmatprep.mubr.f32.mxu0 0.0
    %817 = vmatmul.mubr.f32.gmra.mrb[0].mxu0 %v750
    %v818 = vpop.f32.mrb[0].mxu0
    %v819 = vadd.f32 0.0, %v818
    %v820 = vpop.f32.mrb[0].mxu0
    %821 = vdwg.mxu0
    %v822 = vadd.f32 %v669, %v744
    %v823 = vxor.u32 %v822, 2147483648
    %v824 = vmul.f32 %v823, 1.442695
    %v825 = vpow.pop %v824
    %v826 = vadd.f32 %v825, 1.0
    %v827 = vrcp.pop %v826
    %v828 = vmul.f32 1.0, %v827
    %v829 = vadd.f32 %v744, %v396
    %831 = vrot.lane.b32.xlu0 %v829, 96
    %v832 = vpop.permute.xlu0 %831
    %v834 = vmul.f32 %v828, %v832
    %836 = vrot.lane.b32.xlu0 %v834, 32
    %v837 = vpop.permute.xlu0 %836
    %v839 = vadd.f32 %v669, %v837
    %v840 = vtanh.pop %v839
    %v841 = vsub.f32 1.0, %v828
    %843 = vrot.lane.b32.xlu0 %v840, 112
    %v844 = vpop.permute.xlu0 %843
    %v846 = vmul.f32 %v841, %v844
    %v847 = vmul.f32 %v828, %v634
    %v848 = vadd.f32 %v846, %v847
    %850 = vrot.lane.b32.xlu0 %v819, 48
    %v851 = vpop.permute.xlu0 %850
    %v853 = vadd.f32 %v671, %v851
    %v854 = vxor.u32 %v853, 2147483648
    %v855 = vmul.f32 %v854, 1.442695
    %v856 = vpow.pop %v855
    %v857 = vadd.f32 %v856, 1.0
    %v858 = vrcp.pop %v857
    %v859 = vmul.f32 1.0, %v858
    %v860 = vadd.f32 %v819, %v430
    %862 = vrot.lane.b32.xlu0 %v860, 16
    %v863 = vpop.permute.xlu0 %862
    %v865 = vmul.f32 %v859, %v863
    %867 = vrot.lane.b32.xlu0 %v865, 32
    %v868 = vpop.permute.xlu0 %867
    %v870 = vadd.f32 %v671, %v868
    %v871 = vtanh.pop %v870
    %v872 = vsub.f32 1.0, %v859
    %874 = vrot.lane.b32.xlu0 %v871, 112
    %v875 = vpop.permute.xlu0 %874
    %v877 = vmul.f32 %v872, %v875
    %v878 = vmul.f32 %v859, %v665
    %v879 = vadd.f32 %v877, %v878
    %v880 = vadd.f32 %v666, %v848
    %v881 = vadd.f32 %v667, %v879
    %s882 = scalar_lea.vmem [#allocation2], 6
    %v883 = vld [vmem:[%s882] sm:$0x3]
    %s884 = scalar_lea.vmem [#allocation2], 8
    %v885 = vld [vmem:[%s884] sm:$0x3]
    %887 = vrot.lane.b32.xlu0 %v848, 112
    %v888 = vpop.permute.xlu0 %887
    %v889 = vsel %vm244, %v888, 0
    %891 = vmatprep.subr.mxu0 0.0
    %892 = vmatpush1.msra.mxu0 %v231
    %893 = vmatprep.subr.mxu0 0.0
    %894 = vmatpush1.msra.mxu0 %v232
    %895 = vmatprep.subr.mxu0 0.0
    %896 = vmatpush1.msra.mxu0 0.0
    %897 = vmatprep.subr.mxu0 0.0
    %898 = vmatpush1.msra.mxu0 0.0
    %899 = vmatprep.subr.mxu0 0.0
    %900 = vmatpush1.msra.mxu0 0.0
    %901 = vmatprep.subr.mxu0 0.0
    %902 = vmatpush1.msra.mxu0 0.0
    %903 = vmatprep.subr.mxu0 0.0
    %904 = vmatpush1.msra.mxu0 0.0
    %905 = vmatprep.subr.mxu0 0.0
    %906 = vmatpush1.msra.mxu0 0.0
    %907 = vmatprep.subr.mxu0 0.0
    %908 = vmatpush1.msra.mxu0 0.0
    %909 = vmatprep.subr.mxu0 0.0
    %910 = vmatpush1.msra.mxu0 0.0
    %911 = vmatprep.subr.mxu0 0.0
    %912 = vmatpush1.msra.mxu0 0.0
    %913 = vmatprep.subr.mxu0 0.0
    %914 = vmatpush1.msra.mxu0 0.0
    %915 = vmatprep.subr.mxu0 0.0
    %916 = vmatpush1.msra.mxu0 0.0
    %917 = vmatprep.subr.mxu0 0.0
    %918 = vmatpush1.msra.mxu0 0.0
    %919 = vmatprep.subr.mxu0 0.0
    %920 = vmatpush1.msra.mxu0 0.0
    %921 = vmatprep.subr.mxu0 0.0
    %922 = vmatpush1.msra.mxu0 0.0
    %923 = vmatprep.subr.mxu0 0.0
    %924 = vmatpush1.msra.mxu0 0.0
    %925 = vmatprep.subr.mxu0 0.0
    %926 = vmatpush1.msra.mxu0 0.0
    %927 = vmatprep.subr.mxu0 0.0
    %928 = vmatpush1.msra.mxu0 0.0
    %929 = vmatprep.subr.mxu0 0.0
    %930 = vmatpush1.msra.mxu0 0.0
    %931 = vmatprep.subr.mxu0 0.0
    %932 = vmatpush1.msra.mxu0 0.0
    %933 = vmatprep.subr.mxu0 0.0
    %934 = vmatpush1.msra.mxu0 0.0
    %935 = vmatprep.subr.mxu0 0.0
    %936 = vmatpush1.msra.mxu0 0.0
    %937 = vmatprep.subr.mxu0 0.0
    %938 = vmatpush1.msra.mxu0 0.0
    %939 = vmatprep.subr.mxu0 0.0
    %940 = vmatpush1.msra.mxu0 0.0
    %941 = vmatprep.subr.mxu0 0.0
    %942 = vmatpush1.msra.mxu0 0.0
    %943 = vmatprep.subr.mxu0 0.0
    %944 = vmatpush1.msra.mxu0 0.0
    %945 = vmatprep.subr.mxu0 0.0
    %946 = vmatpush1.msra.mxu0 0.0
    %947 = vmatprep.subr.mxu0 0.0
    %948 = vmatpush1.msra.mxu0 0.0
    %949 = vmatprep.subr.mxu0 0.0
    %950 = vmatpush1.msra.mxu0 0.0
    %951 = vmatprep.subr.mxu0 0.0
    %952 = vmatpush1.msra.mxu0 0.0
    %953 = vmatprep.subr.mxu0 0.0
    %954 = vmatpush1.msra.mxu0 0.0
    %955 = vmatprep.mubr.f32.mxu0 0.0
    %956 = vmatmul.mubr.f32.gmra.mrb[0].mxu0 %v889
    %v957 = vpop.f32.mrb[0].mxu0
    %v958 = vadd.f32 0.0, %v957
    %v959 = vpop.f32.mrb[0].mxu0
    %960 = vdwg.mxu0
    %962 = vrot.lane.b32.xlu0 %v879, 64
    %v963 = vpop.permute.xlu0 %962
    %v964 = vsel %vm244, %v963, 0
    %966 = vmatprep.subr.mxu0 0.0
    %967 = vmatpush1.msra.mxu0 %v233
    %968 = vmatprep.subr.mxu0 0.0
    %969 = vmatpush1.msra.mxu0 %v234
    %970 = vmatprep.subr.mxu0 0.0
    %971 = vmatpush1.msra.mxu0 0.0
    %972 = vmatprep.subr.mxu0 0.0
    %973 = vmatpush1.msra.mxu0 0.0
    %974 = vmatprep.subr.mxu0 0.0
    %975 = vmatpush1.msra.mxu0 0.0
    %976 = vmatprep.subr.mxu0 0.0
    %977 = vmatpush1.msra.mxu0 0.0
    %978 = vmatprep.subr.mxu0 0.0
    %979 = vmatpush1.msra.mxu0 0.0
    %980 = vmatprep.subr.mxu0 0.0
    %981 = vmatpush1.msra.mxu0 0.0
    %982 = vmatprep.subr.mxu0 0.0
    %983 = vmatpush1.msra.mxu0 0.0
    %984 = vmatprep.subr.mxu0 0.0
    %985 = vmatpush1.msra.mxu0 0.0
    %986 = vmatprep.subr.mxu0 0.0
    %987 = vmatpush1.msra.mxu0 0.0
    %988 = vmatprep.subr.mxu0 0.0
    %989 = vmatpush1.msra.mxu0 0.0
    %990 = vmatprep.subr.mxu0 0.0
    %991 = vmatpush1.msra.mxu0 0.0
    %992 = vmatprep.subr.mxu0 0.0
    %993 = vmatpush1.msra.mxu0 0.0
    %994 = vmatprep.subr.mxu0 0.0
    %995 = vmatpush1.msra.mxu0 0.0
    %996 = vmatprep.subr.mxu0 0.0
    %997 = vmatpush1.msra.mxu0 0.0
    %998 = vmatprep.subr.mxu0 0.0
    %999 = vmatpush1.msra.mxu0 0.0
    %1000 = vmatprep.subr.mxu0 0.0
    %1001 = vmatpush1.msra.mxu0 0.0
    %1002 = vmatprep.subr.mxu0 0.0
    %1003 = vmatpush1.msra.mxu0 0.0
    %1004 = vmatprep.subr.mxu0 0.0
    %1005 = vmatpush1.msra.mxu0 0.0
    %1006 = vmatprep.subr.mxu0 0.0
    %1007 = vmatpush1.msra.mxu0 0.0
    %1008 = vmatprep.subr.mxu0 0.0
    %1009 = vmatpush1.msra.mxu0 0.0
    %1010 = vmatprep.subr.mxu0 0.0
    %1011 = vmatpush1.msra.mxu0 0.0
    %1012 = vmatprep.subr.mxu0 0.0
    %1013 = vmatpush1.msra.mxu0 0.0
    %1014 = vmatprep.subr.mxu0 0.0
    %1015 = vmatpush1.msra.mxu0 0.0
    %1016 = vmatprep.subr.mxu0 0.0
    %1017 = vmatpush1.msra.mxu0 0.0
    %1018 = vmatprep.subr.mxu0 0.0
    %1019 = vmatpush1.msra.mxu0 0.0
    %1020 = vmatprep.subr.mxu0 0.0
    %1021 = vmatpush1.msra.mxu0 0.0
    %1022 = vmatprep.subr.mxu0 0.0
    %1023 = vmatpush1.msra.mxu0 0.0
    %1024 = vmatprep.subr.mxu0 0.0
    %1025 = vmatpush1.msra.mxu0 0.0
    %1026 = vmatprep.subr.mxu0 0.0
    %1027 = vmatpush1.msra.mxu0 0.0
    %1028 = vmatprep.subr.mxu0 0.0
    %1029 = vmatpush1.msra.mxu0 0.0
    %1030 = vmatprep.mubr.f32.mxu0 0.0
    %1031 = vmatmul.mubr.f32.gmra.mrb[0].mxu0 %v964
    %v1032 = vpop.f32.mrb[0].mxu0
    %v1033 = vadd.f32 0.0, %v1032
    %v1034 = vpop.f32.mrb[0].mxu0
    %1035 = vdwg.mxu0
    %v1036 = vadd.f32 %v883, %v958
    %v1037 = vxor.u32 %v1036, 2147483648
    %v1038 = vmul.f32 %v1037, 1.442695
    %v1039 = vpow.pop %v1038
    %v1040 = vadd.f32 %v1039, 1.0
    %v1041 = vrcp.pop %v1040
    %v1042 = vmul.f32 1.0, %v1041
    %v1043 = vadd.f32 %v958, %v396
    %1045 = vrot.lane.b32.xlu0 %v1043, 96
    %v1046 = vpop.permute.xlu0 %1045
    %v1048 = vmul.f32 %v1042, %v1046
    %1050 = vrot.lane.b32.xlu0 %v1048, 32
    %v1051 = vpop.permute.xlu0 %1050
    %v1053 = vadd.f32 %v883, %v1051
    %v1054 = vtanh.pop %v1053
    %v1055 = vsub.f32 1.0, %v1042
    %1057 = vrot.lane.b32.xlu0 %v1054, 112
    %v1058 = vpop.permute.xlu0 %1057
    %v1060 = vmul.f32 %v1055, %v1058
    %v1061 = vmul.f32 %v1042, %v848
    %v1062 = vadd.f32 %v1060, %v1061
    %1064 = vrot.lane.b32.xlu0 %v1033, 48
    %v1065 = vpop.permute.xlu0 %1064
    %v1067 = vadd.f32 %v885, %v1065
    %v1068 = vxor.u32 %v1067, 2147483648
    %v1069 = vmul.f32 %v1068, 1.442695
    %v1070 = vpow.pop %v1069
    %v1071 = vadd.f32 %v1070, 1.0
    %v1072 = vrcp.pop %v1071
    %v1073 = vmul.f32 1.0, %v1072
    %v1074 = vadd.f32 %v1033, %v430
    %1076 = vrot.lane.b32.xlu0 %v1074, 16
    %v1077 = vpop.permute.xlu0 %1076
    %v1079 = vmul.f32 %v1073, %v1077
    %1081 = vrot.lane.b32.xlu0 %v1079, 32
    %v1082 = vpop.permute.xlu0 %1081
    %v1084 = vadd.f32 %v885, %v1082
    %v1085 = vtanh.pop %v1084
    %v1086 = vsub.f32 1.0, %v1073
    %1088 = vrot.lane.b32.xlu0 %v1085, 112
    %v1089 = vpop.permute.xlu0 %1088
    %v1091 = vmul.f32 %v1086, %v1089
    %v1092 = vmul.f32 %v1073, %v879
    %v1093 = vadd.f32 %v1091, %v1092
    %v1094 = vadd.f32 %v880, %v1062
    %v1095 = vadd.f32 %v881, %v1093
    %1097 = vrot.lane.b32.xlu0 %v1062, 112
    %v1098 = vpop.permute.xlu0 %1097
    %v1099 = vsel %vm244, %v1098, 0
    %1101 = vmatprep.subr.mxu0 0.0
    %1102 = vmatpush1.msra.mxu0 %v231
    %1103 = vmatprep.subr.mxu0 0.0
    %1104 = vmatpush1.msra.mxu0 %v232
    %1105 = vmatprep.subr.mxu0 0.0
    %1106 = vmatpush1.msra.mxu0 0.0
    %1107 = vmatprep.subr.mxu0 0.0
    %1108 = vmatpush1.msra.mxu0 0.0
    %1109 = vmatprep.subr.mxu0 0.0
    %1110 = vmatpush1.msra.mxu0 0.0
    %1111 = vmatprep.subr.mxu0 0.0
    %1112 = vmatpush1.msra.mxu0 0.0
    %1113 = vmatprep.subr.mxu0 0.0
    %1114 = vmatpush1.msra.mxu0 0.0
    %1115 = vmatprep.subr.mxu0 0.0
    %1116 = vmatpush1.msra.mxu0 0.0
    %1117 = vmatprep.subr.mxu0 0.0
    %1118 = vmatpush1.msra.mxu0 0.0
    %1119 = vmatprep.subr.mxu0 0.0
    %1120 = vmatpush1.msra.mxu0 0.0
    %1121 = vmatprep.subr.mxu0 0.0
    %1122 = vmatpush1.msra.mxu0 0.0
    %1123 = vmatprep.subr.mxu0 0.0
    %1124 = vmatpush1.msra.mxu0 0.0
    %1125 = vmatprep.subr.mxu0 0.0
    %1126 = vmatpush1.msra.mxu0 0.0
    %1127 = vmatprep.subr.mxu0 0.0
    %1128 = vmatpush1.msra.mxu0 0.0
    %1129 = vmatprep.subr.mxu0 0.0
    %1130 = vmatpush1.msra.mxu0 0.0
    %1131 = vmatprep.subr.mxu0 0.0
    %1132 = vmatpush1.msra.mxu0 0.0
    %1133 = vmatprep.subr.mxu0 0.0
    %1134 = vmatpush1.msra.mxu0 0.0
    %1135 = vmatprep.subr.mxu0 0.0
    %1136 = vmatpush1.msra.mxu0 0.0
    %1137 = vmatprep.subr.mxu0 0.0
    %1138 = vmatpush1.msra.mxu0 0.0
    %1139 = vmatprep.subr.mxu0 0.0
    %1140 = vmatpush1.msra.mxu0 0.0
    %1141 = vmatprep.subr.mxu0 0.0
    %1142 = vmatpush1.msra.mxu0 0.0
    %1143 = vmatprep.subr.mxu0 0.0
    %1144 = vmatpush1.msra.mxu0 0.0
    %1145 = vmatprep.subr.mxu0 0.0
    %1146 = vmatpush1.msra.mxu0 0.0
    %1147 = vmatprep.subr.mxu0 0.0
    %1148 = vmatpush1.msra.mxu0 0.0
    %1149 = vmatprep.subr.mxu0 0.0
    %1150 = vmatpush1.msra.mxu0 0.0
    %1151 = vmatprep.subr.mxu0 0.0
    %1152 = vmatpush1.msra.mxu0 0.0
    %1153 = vmatprep.subr.mxu0 0.0
    %1154 = vmatpush1.msra.mxu0 0.0
    %1155 = vmatprep.subr.mxu0 0.0
    %1156 = vmatpush1.msra.mxu0 0.0
    %1157 = vmatprep.subr.mxu0 0.0
    %1158 = vmatpush1.msra.mxu0 0.0
    %1159 = vmatprep.subr.mxu0 0.0
    %1160 = vmatpush1.msra.mxu0 0.0
    %1161 = vmatprep.subr.mxu0 0.0
    %1162 = vmatpush1.msra.mxu0 0.0
    %1163 = vmatprep.subr.mxu0 0.0
    %1164 = vmatpush1.msra.mxu0 0.0
    %1165 = vmatprep.mubr.f32.mxu0 0.0
    %1166 = vmatmul.mubr.f32.gmra.mrb[0].mxu0 %v1099
    %v1167 = vpop.f32.mrb[0].mxu0
    %v1168 = vadd.f32 0.0, %v1167
    %v1169 = vpop.f32.mrb[0].mxu0
    %1170 = vdwg.mxu0
    %1172 = vrot.lane.b32.xlu0 %v1093, 64
    %v1173 = vpop.permute.xlu0 %1172
    %v1174 = vsel %vm244, %v1173, 0
    %1176 = vmatprep.subr.mxu0 0.0
    %1177 = vmatpush1.msra.mxu0 %v233
    %1178 = vmatprep.subr.mxu0 0.0
    %1179 = vmatpush1.msra.mxu0 %v234
    %1180 = vmatprep.subr.mxu0 0.0
    %1181 = vmatpush1.msra.mxu0 0.0
    %1182 = vmatprep.subr.mxu0 0.0
    %1183 = vmatpush1.msra.mxu0 0.0
    %1184 = vmatprep.subr.mxu0 0.0
    %1185 = vmatpush1.msra.mxu0 0.0
    %1186 = vmatprep.subr.mxu0 0.0
    %1187 = vmatpush1.msra.mxu0 0.0
    %1188 = vmatprep.subr.mxu0 0.0
    %1189 = vmatpush1.msra.mxu0 0.0
    %1190 = vmatprep.subr.mxu0 0.0
    %1191 = vmatpush1.msra.mxu0 0.0
    %1192 = vmatprep.subr.mxu0 0.0
    %1193 = vmatpush1.msra.mxu0 0.0
    %1194 = vmatprep.subr.mxu0 0.0
    %1195 = vmatpush1.msra.mxu0 0.0
    %1196 = vmatprep.subr.mxu0 0.0
    %1197 = vmatpush1.msra.mxu0 0.0
    %1198 = vmatprep.subr.mxu0 0.0
    %1199 = vmatpush1.msra.mxu0 0.0
    %1200 = vmatprep.subr.mxu0 0.0
    %1201 = vmatpush1.msra.mxu0 0.0
    %1202 = vmatprep.subr.mxu0 0.0
    %1203 = vmatpush1.msra.mxu0 0.0
    %1204 = vmatprep.subr.mxu0 0.0
    %1205 = vmatpush1.msra.mxu0 0.0
    %1206 = vmatprep.subr.mxu0 0.0
    %1207 = vmatpush1.msra.mxu0 0.0
    %1208 = vmatprep.subr.mxu0 0.0
    %1209 = vmatpush1.msra.mxu0 0.0
    %1210 = vmatprep.subr.mxu0 0.0
    %1211 = vmatpush1.msra.mxu0 0.0
    %1212 = vmatprep.subr.mxu0 0.0
    %1213 = vmatpush1.msra.mxu0 0.0
    %1214 = vmatprep.subr.mxu0 0.0
    %1215 = vmatpush1.msra.mxu0 0.0
    %1216 = vmatprep.subr.mxu0 0.0
    %1217 = vmatpush1.msra.mxu0 0.0
    %1218 = vmatprep.subr.mxu0 0.0
    %1219 = vmatpush1.msra.mxu0 0.0
    %1220 = vmatprep.subr.mxu0 0.0
    %1221 = vmatpush1.msra.mxu0 0.0
    %1222 = vmatprep.subr.mxu0 0.0
    %1223 = vmatpush1.msra.mxu0 0.0
    %1224 = vmatprep.subr.mxu0 0.0
    %1225 = vmatpush1.msra.mxu0 0.0
    %1226 = vmatprep.subr.mxu0 0.0
    %1227 = vmatpush1.msra.mxu0 0.0
    %1228 = vmatprep.subr.mxu0 0.0
    %1229 = vmatpush1.msra.mxu0 0.0
    %1230 = vmatprep.subr.mxu0 0.0
    %1231 = vmatpush1.msra.mxu0 0.0
    %1232 = vmatprep.subr.mxu0 0.0
    %1233 = vmatpush1.msra.mxu0 0.0
    %1234 = vmatprep.subr.mxu0 0.0
    %1235 = vmatpush1.msra.mxu0 0.0
    %1236 = vmatprep.subr.mxu0 0.0
    %1237 = vmatpush1.msra.mxu0 0.0
    %1238 = vmatprep.subr.mxu0 0.0
    %1239 = vmatpush1.msra.mxu0 0.0
    %1240 = vmatprep.mubr.f32.mxu0 0.0
    %1241 = vmatmul.mubr.f32.gmra.mrb[0].mxu0 %v1174
    %v1242 = vpop.f32.mrb[0].mxu0
    %v1243 = vadd.f32 0.0, %v1242
    %v1244 = vpop.f32.mrb[0].mxu0
    %1245 = vdwg.mxu0
    %v1246 = vadd.f32 %v885, %v1168
    %v1247 = vxor.u32 %v1246, 2147483648
    %v1248 = vmul.f32 %v1247, 1.442695
    %v1249 = vpow.pop %v1248
    %v1250 = vadd.f32 %v1249, 1.0
    %v1251 = vrcp.pop %v1250
    %v1252 = vmul.f32 1.0, %v1251
    %v1253 = vadd.f32 %v1168, %v396
    %1255 = vrot.lane.b32.xlu0 %v1253, 96
    %v1256 = vpop.permute.xlu0 %1255
    %v1258 = vmul.f32 %v1252, %v1256
    %1260 = vrot.lane.b32.xlu0 %v1258, 32
    %v1261 = vpop.permute.xlu0 %1260
    %v1263 = vadd.f32 %v885, %v1261
    %v1264 = vtanh.pop %v1263
    %v1265 = vsub.f32 1.0, %v1252
    %1267 = vrot.lane.b32.xlu0 %v1264, 112
    %v1268 = vpop.permute.xlu0 %1267
    %v1270 = vmul.f32 %v1265, %v1268
    %v1271 = vmul.f32 %v1252, %v1062
    %v1272 = vadd.f32 %v1270, %v1271
    %1274 = vrot.lane.b32.xlu0 %v1243, 48
    %v1275 = vpop.permute.xlu0 %1274
    %v1277 = vadd.f32 %v883, %v1275
    %v1278 = vxor.u32 %v1277, 2147483648
    %v1279 = vmul.f32 %v1278, 1.442695
    %v1280 = vpow.pop %v1279
    %v1281 = vadd.f32 %v1280, 1.0
    %v1282 = vrcp.pop %v1281
    %v1283 = vmul.f32 1.0, %v1282
    %v1284 = vadd.f32 %v1243, %v430
    %1286 = vrot.lane.b32.xlu0 %v1284, 16
    %v1287 = vpop.permute.xlu0 %1286
    %v1289 = vmul.f32 %v1283, %v1287
    %1291 = vrot.lane.b32.xlu0 %v1289, 32
    %v1292 = vpop.permute.xlu0 %1291
    %v1294 = vadd.f32 %v883, %v1292
    %v1295 = vtanh.pop %v1294
    %v1296 = vsub.f32 1.0, %v1283
    %1298 = vrot.lane.b32.xlu0 %v1295, 112
    %v1299 = vpop.permute.xlu0 %1298
    %v1301 = vmul.f32 %v1296, %v1299
    %v1302 = vmul.f32 %v1283, %v1093
    %v1303 = vadd.f32 %v1301, %v1302
    %v1304 = vadd.f32 %v1094, %v1272
    %v1305 = vadd.f32 %v1095, %v1303
    %1307 = vrot.lane.b32.xlu0 %v1272, 112
    %v1308 = vpop.permute.xlu0 %1307
    %v1309 = vsel %vm244, %v1308, 0
    %1311 = vmatprep.subr.mxu0 0.0
    %1312 = vmatpush1.msra.mxu0 %v231
    %1313 = vmatprep.subr.mxu0 0.0
    %1314 = vmatpush1.msra.mxu0 %v232
    %1315 = vmatprep.subr.mxu0 0.0
    %1316 = vmatpush1.msra.mxu0 0.0
    %1317 = vmatprep.subr.mxu0 0.0
    %1318 = vmatpush1.msra.mxu0 0.0
    %1319 = vmatprep.subr.mxu0 0.0
    %1320 = vmatpush1.msra.mxu0 0.0
    %1321 = vmatprep.subr.mxu0 0.0
    %1322 = vmatpush1.msra.mxu0 0.0
    %1323 = vmatprep.subr.mxu0 0.0
    %1324 = vmatpush1.msra.mxu0 0.0
    %1325 = vmatprep.subr.mxu0 0.0
    %1326 = vmatpush1.msra.mxu0 0.0
    %1327 = vmatprep.subr.mxu0 0.0
    %1328 = vmatpush1.msra.mxu0 0.0
    %1329 = vmatprep.subr.mxu0 0.0
    %1330 = vmatpush1.msra.mxu0 0.0
    %1331 = vmatprep.subr.mxu0 0.0
    %1332 = vmatpush1.msra.mxu0 0.0
    %1333 = vmatprep.subr.mxu0 0.0
    %1334 = vmatpush1.msra.mxu0 0.0
    %1335 = vmatprep.subr.mxu0 0.0
    %1336 = vmatpush1.msra.mxu0 0.0
    %1337 = vmatprep.subr.mxu0 0.0
    %1338 = vmatpush1.msra.mxu0 0.0
    %1339 = vmatprep.subr.mxu0 0.0
    %1340 = vmatpush1.msra.mxu0 0.0
    %1341 = vmatprep.subr.mxu0 0.0
    %1342 = vmatpush1.msra.mxu0 0.0
    %1343 = vmatprep.subr.mxu0 0.0
    %1344 = vmatpush1.msra.mxu0 0.0
    %1345 = vmatprep.subr.mxu0 0.0
    %1346 = vmatpush1.msra.mxu0 0.0
    %1347 = vmatprep.subr.mxu0 0.0
    %1348 = vmatpush1.msra.mxu0 0.0
    %1349 = vmatprep.subr.mxu0 0.0
    %1350 = vmatpush1.msra.mxu0 0.0
    %1351 = vmatprep.subr.mxu0 0.0
    %1352 = vmatpush1.msra.mxu0 0.0
    %1353 = vmatprep.subr.mxu0 0.0
    %1354 = vmatpush1.msra.mxu0 0.0
    %1355 = vmatprep.subr.mxu0 0.0
    %1356 = vmatpush1.msra.mxu0 0.0
    %1357 = vmatprep.subr.mxu0 0.0
    %1358 = vmatpush1.msra.mxu0 0.0
    %1359 = vmatprep.subr.mxu0 0.0
    %1360 = vmatpush1.msra.mxu0 0.0
    %1361 = vmatprep.subr.mxu0 0.0
    %1362 = vmatpush1.msra.mxu0 0.0
    %1363 = vmatprep.subr.mxu0 0.0
    %1364 = vmatpush1.msra.mxu0 0.0
    %1365 = vmatprep.subr.mxu0 0.0
    %1366 = vmatpush1.msra.mxu0 0.0
    %1367 = vmatprep.subr.mxu0 0.0
    %1368 = vmatpush1.msra.mxu0 0.0
    %1369 = vmatprep.subr.mxu0 0.0
    %1370 = vmatpush1.msra.mxu0 0.0
    %1371 = vmatprep.subr.mxu0 0.0
    %1372 = vmatpush1.msra.mxu0 0.0
    %1373 = vmatprep.subr.mxu0 0.0
    %1374 = vmatpush1.msra.mxu0 0.0
    %1375 = vmatprep.mubr.f32.mxu0 0.0
    %1376 = vmatmul.mubr.f32.gmra.mrb[0].mxu0 %v1309
    %v1377 = vpop.f32.mrb[0].mxu0
    %v1378 = vadd.f32 0.0, %v1377
    %v1379 = vpop.f32.mrb[0].mxu0
    %1380 = vdwg.mxu0
    %1382 = vrot.lane.b32.xlu0 %v1303, 64
    %v1383 = vpop.permute.xlu0 %1382
    %v1384 = vsel %vm244, %v1383, 0
    %1386 = vmatprep.subr.mxu0 0.0
    %1387 = vmatpush1.msra.mxu0 %v233
    %1388 = vmatprep.subr.mxu0 0.0
    %1389 = vmatpush1.msra.mxu0 %v234
    %1390 = vmatprep.subr.mxu0 0.0
    %1391 = vmatpush1.msra.mxu0 0.0
    %1392 = vmatprep.subr.mxu0 0.0
    %1393 = vmatpush1.msra.mxu0 0.0
    %1394 = vmatprep.subr.mxu0 0.0
    %1395 = vmatpush1.msra.mxu0 0.0
    %1396 = vmatprep.subr.mxu0 0.0
    %1397 = vmatpush1.msra.mxu0 0.0
    %1398 = vmatprep.subr.mxu0 0.0
    %1399 = vmatpush1.msra.mxu0 0.0
    %1400 = vmatprep.subr.mxu0 0.0
    %1401 = vmatpush1.msra.mxu0 0.0
    %1402 = vmatprep.subr.mxu0 0.0
    %1403 = vmatpush1.msra.mxu0 0.0
    %1404 = vmatprep.subr.mxu0 0.0
    %1405 = vmatpush1.msra.mxu0 0.0
    %1406 = vmatprep.subr.mxu0 0.0
    %1407 = vmatpush1.msra.mxu0 0.0
    %1408 = vmatprep.subr.mxu0 0.0
    %1409 = vmatpush1.msra.mxu0 0.0
    %1410 = vmatprep.subr.mxu0 0.0
    %1411 = vmatpush1.msra.mxu0 0.0
    %1412 = vmatprep.subr.mxu0 0.0
    %1413 = vmatpush1.msra.mxu0 0.0
    %1414 = vmatprep.subr.mxu0 0.0
    %1415 = vmatpush1.msra.mxu0 0.0
    %1416 = vmatprep.subr.mxu0 0.0
    %1417 = vmatpush1.msra.mxu0 0.0
    %1418 = vmatprep.subr.mxu0 0.0
    %1419 = vmatpush1.msra.mxu0 0.0
    %1420 = vmatprep.subr.mxu0 0.0
    %1421 = vmatpush1.msra.mxu0 0.0
    %1422 = vmatprep.subr.mxu0 0.0
    %1423 = vmatpush1.msra.mxu0 0.0
    %1424 = vmatprep.subr.mxu0 0.0
    %1425 = vmatpush1.msra.mxu0 0.0
    %1426 = vmatprep.subr.mxu0 0.0
    %1427 = vmatpush1.msra.mxu0 0.0
    %1428 = vmatprep.subr.mxu0 0.0
    %1429 = vmatpush1.msra.mxu0 0.0
    %1430 = vmatprep.subr.mxu0 0.0
    %1431 = vmatpush1.msra.mxu0 0.0
    %1432 = vmatprep.subr.mxu0 0.0
    %1433 = vmatpush1.msra.mxu0 0.0
    %1434 = vmatprep.subr.mxu0 0.0
    %1435 = vmatpush1.msra.mxu0 0.0
    %1436 = vmatprep.subr.mxu0 0.0
    %1437 = vmatpush1.msra.mxu0 0.0
    %1438 = vmatprep.subr.mxu0 0.0
    %1439 = vmatpush1.msra.mxu0 0.0
    %1440 = vmatprep.subr.mxu0 0.0
    %1441 = vmatpush1.msra.mxu0 0.0
    %1442 = vmatprep.subr.mxu0 0.0
    %1443 = vmatpush1.msra.mxu0 0.0
    %1444 = vmatprep.subr.mxu0 0.0
    %1445 = vmatpush1.msra.mxu0 0.0
    %1446 = vmatprep.subr.mxu0 0.0
    %1447 = vmatpush1.msra.mxu0 0.0
    %1448 = vmatprep.subr.mxu0 0.0
    %1449 = vmatpush1.msra.mxu0 0.0
    %1450 = vmatprep.mubr.f32.mxu0 0.0
    %1451 = vmatmul.mubr.f32.gmra.mrb[0].mxu0 %v1384
    %v1452 = vpop.f32.mrb[0].mxu0
    %v1453 = vadd.f32 0.0, %v1452
    %v1454 = vpop.f32.mrb[0].mxu0
    %1455 = vdwg.mxu0
    %v1456 = vadd.f32 %v671, %v1378
    %v1457 = vxor.u32 %v1456, 2147483648
    %v1458 = vmul.f32 %v1457, 1.442695
    %v1459 = vpow.pop %v1458
    %v1460 = vadd.f32 %v1459, 1.0
    %v1461 = vrcp.pop %v1460
    %v1462 = vmul.f32 1.0, %v1461
    %v1463 = vadd.f32 %v1378, %v396
    %1465 = vrot.lane.b32.xlu0 %v1463, 96
    %v1466 = vpop.permute.xlu0 %1465
    %v1468 = vmul.f32 %v1462, %v1466
    %1470 = vrot.lane.b32.xlu0 %v1468, 32
    %v1471 = vpop.permute.xlu0 %1470
    %v1473 = vadd.f32 %v671, %v1471
    %v1474 = vtanh.pop %v1473
    %v1475 = vsub.f32 1.0, %v1462
    %1477 = vrot.lane.b32.xlu0 %v1474, 112
    %v1478 = vpop.permute.xlu0 %1477
    %v1480 = vmul.f32 %v1475, %v1478
    %v1481 = vmul.f32 %v1462, %v1272
    %v1482 = vadd.f32 %v1480, %v1481
    %1484 = vrot.lane.b32.xlu0 %v1453, 48
    %v1485 = vpop.permute.xlu0 %1484
    %v1487 = vadd.f32 %v669, %v1485
    %v1488 = vxor.u32 %v1487, 2147483648
    %v1489 = vmul.f32 %v1488, 1.442695
    %v1490 = vpow.pop %v1489
    %v1491 = vadd.f32 %v1490, 1.0
    %v1492 = vrcp.pop %v1491
    %v1493 = vmul.f32 1.0, %v1492
    %v1494 = vadd.f32 %v1453, %v430
    %1496 = vrot.lane.b32.xlu0 %v1494, 16
    %v1497 = vpop.permute.xlu0 %1496
    %v1499 = vmul.f32 %v1493, %v1497
    %1501 = vrot.lane.b32.xlu0 %v1499, 32
    %v1502 = vpop.permute.xlu0 %1501
    %v1504 = vadd.f32 %v669, %v1502
    %v1505 = vtanh.pop %v1504
    %v1506 = vsub.f32 1.0, %v1493
    %1508 = vrot.lane.b32.xlu0 %v1505, 112
    %v1509 = vpop.permute.xlu0 %1508
    %v1511 = vmul.f32 %v1506, %v1509
    %v1512 = vmul.f32 %v1493, %v1303
    %v1513 = vadd.f32 %v1511, %v1512
    %v1514 = vadd.f32 %v1304, %v1482
    %v1515 = vadd.f32 %v1305, %v1513
    %1517 = vrot.lane.b32.xlu0 %v1482, 112
    %v1518 = vpop.permute.xlu0 %1517
    %v1519 = vsel %vm244, %v1518, 0
    %1521 = vmatprep.subr.mxu0 0.0
    %1522 = vmatpush1.msra.mxu0 %v231
    %1523 = vmatprep.subr.mxu0 0.0
    %1524 = vmatpush1.msra.mxu0 %v232
    %1525 = vmatprep.subr.mxu0 0.0
    %1526 = vmatpush1.msra.mxu0 0.0
    %1527 = vmatprep.subr.mxu0 0.0
    %1528 = vmatpush1.msra.mxu0 0.0
    %1529 = vmatprep.subr.mxu0 0.0
    %1530 = vmatpush1.msra.mxu0 0.0
    %1531 = vmatprep.subr.mxu0 0.0
    %1532 = vmatpush1.msra.mxu0 0.0
    %1533 = vmatprep.subr.mxu0 0.0
    %1534 = vmatpush1.msra.mxu0 0.0
    %1535 = vmatprep.subr.mxu0 0.0
    %1536 = vmatpush1.msra.mxu0 0.0
    %1537 = vmatprep.subr.mxu0 0.0
    %1538 = vmatpush1.msra.mxu0 0.0
    %1539 = vmatprep.subr.mxu0 0.0
    %1540 = vmatpush1.msra.mxu0 0.0
    %1541 = vmatprep.subr.mxu0 0.0
    %1542 = vmatpush1.msra.mxu0 0.0
    %1543 = vmatprep.subr.mxu0 0.0
    %1544 = vmatpush1.msra.mxu0 0.0
    %1545 = vmatprep.subr.mxu0 0.0
    %1546 = vmatpush1.msra.mxu0 0.0
    %1547 = vmatprep.subr.mxu0 0.0
    %1548 = vmatpush1.msra.mxu0 0.0
    %1549 = vmatprep.subr.mxu0 0.0
    %1550 = vmatpush1.msra.mxu0 0.0
    %1551 = vmatprep.subr.mxu0 0.0
    %1552 = vmatpush1.msra.mxu0 0.0
    %1553 = vmatprep.subr.mxu0 0.0
    %1554 = vmatpush1.msra.mxu0 0.0
    %1555 = vmatprep.subr.mxu0 0.0
    %1556 = vmatpush1.msra.mxu0 0.0
    %1557 = vmatprep.subr.mxu0 0.0
    %1558 = vmatpush1.msra.mxu0 0.0
    %1559 = vmatprep.subr.mxu0 0.0
    %1560 = vmatpush1.msra.mxu0 0.0
    %1561 = vmatprep.subr.mxu0 0.0
    %1562 = vmatpush1.msra.mxu0 0.0
    %1563 = vmatprep.subr.mxu0 0.0
    %1564 = vmatpush1.msra.mxu0 0.0
    %1565 = vmatprep.subr.mxu0 0.0
    %1566 = vmatpush1.msra.mxu0 0.0
    %1567 = vmatprep.subr.mxu0 0.0
    %1568 = vmatpush1.msra.mxu0 0.0
    %1569 = vmatprep.subr.mxu0 0.0
    %1570 = vmatpush1.msra.mxu0 0.0
    %1571 = vmatprep.subr.mxu0 0.0
    %1572 = vmatpush1.msra.mxu0 0.0
    %1573 = vmatprep.subr.mxu0 0.0
    %1574 = vmatpush1.msra.mxu0 0.0
    %1575 = vmatprep.subr.mxu0 0.0
    %1576 = vmatpush1.msra.mxu0 0.0
    %1577 = vmatprep.subr.mxu0 0.0
    %1578 = vmatpush1.msra.mxu0 0.0
    %1579 = vmatprep.subr.mxu0 0.0
    %1580 = vmatpush1.msra.mxu0 0.0
    %1581 = vmatprep.subr.mxu0 0.0
    %1582 = vmatpush1.msra.mxu0 0.0
    %1583 = vmatprep.subr.mxu0 0.0
    %1584 = vmatpush1.msra.mxu0 0.0
    %1585 = vmatprep.mubr.f32.mxu0 0.0
    %1586 = vmatmul.mubr.f32.gmra.mrb[0].mxu0 %v1519
    %v1587 = vpop.f32.mrb[0].mxu0
    %v1588 = vadd.f32 0.0, %v1587
    %v1589 = vpop.f32.mrb[0].mxu0
    %1590 = vdwg.mxu0
    %1592 = vrot.lane.b32.xlu0 %v1513, 64
    %v1593 = vpop.permute.xlu0 %1592
    %v1594 = vsel %vm244, %v1593, 0
    %1596 = vmatprep.subr.mxu0 0.0
    %1597 = vmatpush1.msra.mxu0 %v233
    %1598 = vmatprep.subr.mxu0 0.0
    %1599 = vmatpush1.msra.mxu0 %v234
    %1600 = vmatprep.subr.mxu0 0.0
    %1601 = vmatpush1.msra.mxu0 0.0
    %1602 = vmatprep.subr.mxu0 0.0
    %1603 = vmatpush1.msra.mxu0 0.0
    %1604 = vmatprep.subr.mxu0 0.0
    %1605 = vmatpush1.msra.mxu0 0.0
    %1606 = vmatprep.subr.mxu0 0.0
    %1607 = vmatpush1.msra.mxu0 0.0
    %1608 = vmatprep.subr.mxu0 0.0
    %1609 = vmatpush1.msra.mxu0 0.0
    %1610 = vmatprep.subr.mxu0 0.0
    %1611 = vmatpush1.msra.mxu0 0.0
    %1612 = vmatprep.subr.mxu0 0.0
    %1613 = vmatpush1.msra.mxu0 0.0
    %1614 = vmatprep.subr.mxu0 0.0
    %1615 = vmatpush1.msra.mxu0 0.0
    %1616 = vmatprep.subr.mxu0 0.0
    %1617 = vmatpush1.msra.mxu0 0.0
    %1618 = vmatprep.subr.mxu0 0.0
    %1619 = vmatpush1.msra.mxu0 0.0
    %1620 = vmatprep.subr.mxu0 0.0
    %1621 = vmatpush1.msra.mxu0 0.0
    %1622 = vmatprep.subr.mxu0 0.0
    %1623 = vmatpush1.msra.mxu0 0.0
    %1624 = vmatprep.subr.mxu0 0.0
    %1625 = vmatpush1.msra.mxu0 0.0
    %1626 = vmatprep.subr.mxu0 0.0
    %1627 = vmatpush1.msra.mxu0 0.0
    %1628 = vmatprep.subr.mxu0 0.0
    %1629 = vmatpush1.msra.mxu0 0.0
    %1630 = vmatprep.subr.mxu0 0.0
    %1631 = vmatpush1.msra.mxu0 0.0
    %1632 = vmatprep.subr.mxu0 0.0
    %1633 = vmatpush1.msra.mxu0 0.0
    %1634 = vmatprep.subr.mxu0 0.0
    %1635 = vmatpush1.msra.mxu0 0.0
    %1636 = vmatprep.subr.mxu0 0.0
    %1637 = vmatpush1.msra.mxu0 0.0
    %1638 = vmatprep.subr.mxu0 0.0
    %1639 = vmatpush1.msra.mxu0 0.0
    %1640 = vmatprep.subr.mxu0 0.0
    %1641 = vmatpush1.msra.mxu0 0.0
    %1642 = vmatprep.subr.mxu0 0.0
    %1643 = vmatpush1.msra.mxu0 0.0
    %1644 = vmatprep.subr.mxu0 0.0
    %1645 = vmatpush1.msra.mxu0 0.0
    %1646 = vmatprep.subr.mxu0 0.0
    %1647 = vmatpush1.msra.mxu0 0.0
    %1648 = vmatprep.subr.mxu0 0.0
    %1649 = vmatpush1.msra.mxu0 0.0
    %1650 = vmatprep.subr.mxu0 0.0
    %1651 = vmatpush1.msra.mxu0 0.0
    %1652 = vmatprep.subr.mxu0 0.0
    %1653 = vmatpush1.msra.mxu0 0.0
    %1654 = vmatprep.subr.mxu0 0.0
    %1655 = vmatpush1.msra.mxu0 0.0
    %1656 = vmatprep.subr.mxu0 0.0
    %1657 = vmatpush1.msra.mxu0 0.0
    %1658 = vmatprep.subr.mxu0 0.0
    %1659 = vmatpush1.msra.mxu0 0.0
    %1660 = vmatprep.mubr.f32.mxu0 0.0
    %1661 = vmatmul.mubr.f32.gmra.mrb[0].mxu0 %v1594
    %v1662 = vpop.f32.mrb[0].mxu0
    %v1663 = vadd.f32 0.0, %v1662
    %v1664 = vpop.f32.mrb[0].mxu0
    %1665 = vdwg.mxu0
    %v1666 = vadd.f32 %v457, %v1588
    %v1667 = vxor.u32 %v1666, 2147483648
    %v1668 = vmul.f32 %v1667, 1.442695
    %v1669 = vpow.pop %v1668
    %v1670 = vadd.f32 %v1669, 1.0
    %v1671 = vrcp.pop %v1670
    %v1672 = vmul.f32 1.0, %v1671
    %v1673 = vadd.f32 %v1588, %v396
    %1675 = vrot.lane.b32.xlu0 %v1673, 96
    %v1676 = vpop.permute.xlu0 %1675
    %v1678 = vmul.f32 %v1672, %v1676
    %1680 = vrot.lane.b32.xlu0 %v1678, 32
    %v1681 = vpop.permute.xlu0 %1680
    %v1683 = vadd.f32 %v457, %v1681
    %v1684 = vtanh.pop %v1683
    %v1685 = vsub.f32 1.0, %v1672
    %1687 = vrot.lane.b32.xlu0 %v1684, 112
    %v1688 = vpop.permute.xlu0 %1687
    %v1690 = vmul.f32 %v1685, %v1688
    %v1691 = vmul.f32 %v1672, %v1482
    %v1692 = vadd.f32 %v1690, %v1691
    %1694 = vrot.lane.b32.xlu0 %v1663, 48
    %v1695 = vpop.permute.xlu0 %1694
    %v1697 = vadd.f32 %v455, %v1695
    %v1698 = vxor.u32 %v1697, 2147483648
    %v1699 = vmul.f32 %v1698, 1.442695
    %v1700 = vpow.pop %v1699
    %v1701 = vadd.f32 %v1700, 1.0
    %v1702 = vrcp.pop %v1701
    %v1703 = vmul.f32 1.0, %v1702
    %v1704 = vadd.f32 %v1663, %v430
    %1706 = vrot.lane.b32.xlu0 %v1704, 16
    %v1707 = vpop.permute.xlu0 %1706
    %v1709 = vmul.f32 %v1703, %v1707
    %1711 = vrot.lane.b32.xlu0 %v1709, 32
    %v1712 = vpop.permute.xlu0 %1711
    %v1714 = vadd.f32 %v455, %v1712
    %v1715 = vtanh.pop %v1714
    %v1716 = vsub.f32 1.0, %v1703
    %1718 = vrot.lane.b32.xlu0 %v1715, 112
    %v1719 = vpop.permute.xlu0 %1718
    %v1721 = vmul.f32 %v1716, %v1719
    %v1722 = vmul.f32 %v1703, %v1513
    %v1723 = vadd.f32 %v1721, %v1722
    %v1724 = vadd.f32 %v1514, %v1692
    %v1725 = vadd.f32 %v1515, %v1723
    %1727 = vrot.lane.b32.xlu0 %v1692, 112
    %v1728 = vpop.permute.xlu0 %1727
    %v1729 = vsel %vm244, %v1728, 0
    %1731 = vmatprep.subr.mxu0 0.0
    %1732 = vmatpush1.msra.mxu0 %v231
    %1733 = vmatprep.subr.mxu0 0.0
    %1734 = vmatpush1.msra.mxu0 %v232
    %1735 = vmatprep.subr.mxu0 0.0
    %1736 = vmatpush1.msra.mxu0 0.0
    %1737 = vmatprep.subr.mxu0 0.0
    %1738 = vmatpush1.msra.mxu0 0.0
    %1739 = vmatprep.subr.mxu0 0.0
    %1740 = vmatpush1.msra.mxu0 0.0
    %1741 = vmatprep.subr.mxu0 0.0
    %1742 = vmatpush1.msra.mxu0 0.0
    %1743 = vmatprep.subr.mxu0 0.0
    %1744 = vmatpush1.msra.mxu0 0.0
    %1745 = vmatprep.subr.mxu0 0.0
    %1746 = vmatpush1.msra.mxu0 0.0
    %1747 = vmatprep.subr.mxu0 0.0
    %1748 = vmatpush1.msra.mxu0 0.0
    %1749 = vmatprep.subr.mxu0 0.0
    %1750 = vmatpush1.msra.mxu0 0.0
    %1751 = vmatprep.subr.mxu0 0.0
    %1752 = vmatpush1.msra.mxu0 0.0
    %1753 = vmatprep.subr.mxu0 0.0
    %1754 = vmatpush1.msra.mxu0 0.0
    %1755 = vmatprep.subr.mxu0 0.0
    %1756 = vmatpush1.msra.mxu0 0.0
    %1757 = vmatprep.subr.mxu0 0.0
    %1758 = vmatpush1.msra.mxu0 0.0
    %1759 = vmatprep.subr.mxu0 0.0
    %1760 = vmatpush1.msra.mxu0 0.0
    %1761 = vmatprep.subr.mxu0 0.0
    %1762 = vmatpush1.msra.mxu0 0.0
    %1763 = vmatprep.subr.mxu0 0.0
    %1764 = vmatpush1.msra.mxu0 0.0
    %1765 = vmatprep.subr.mxu0 0.0
    %1766 = vmatpush1.msra.mxu0 0.0
    %1767 = vmatprep.subr.mxu0 0.0
    %1768 = vmatpush1.msra.mxu0 0.0
    %1769 = vmatprep.subr.mxu0 0.0
    %1770 = vmatpush1.msra.mxu0 0.0
    %1771 = vmatprep.subr.mxu0 0.0
    %1772 = vmatpush1.msra.mxu0 0.0
    %1773 = vmatprep.subr.mxu0 0.0
    %1774 = vmatpush1.msra.mxu0 0.0
    %1775 = vmatprep.subr.mxu0 0.0
    %1776 = vmatpush1.msra.mxu0 0.0
    %1777 = vmatprep.subr.mxu0 0.0
    %1778 = vmatpush1.msra.mxu0 0.0
    %1779 = vmatprep.subr.mxu0 0.0
    %1780 = vmatpush1.msra.mxu0 0.0
    %1781 = vmatprep.subr.mxu0 0.0
    %1782 = vmatpush1.msra.mxu0 0.0
    %1783 = vmatprep.subr.mxu0 0.0
    %1784 = vmatpush1.msra.mxu0 0.0
    %1785 = vmatprep.subr.mxu0 0.0
    %1786 = vmatpush1.msra.mxu0 0.0
    %1787 = vmatprep.subr.mxu0 0.0
    %1788 = vmatpush1.msra.mxu0 0.0
    %1789 = vmatprep.subr.mxu0 0.0
    %1790 = vmatpush1.msra.mxu0 0.0
    %1791 = vmatprep.subr.mxu0 0.0
    %1792 = vmatpush1.msra.mxu0 0.0
    %1793 = vmatprep.subr.mxu0 0.0
    %1794 = vmatpush1.msra.mxu0 0.0
    %1795 = vmatprep.mubr.f32.mxu0 0.0
    %1796 = vmatmul.mubr.f32.gmra.mrb[0].mxu0 %v1729
    %v1797 = vpop.f32.mrb[0].mxu0
    %v1798 = vadd.f32 0.0, %v1797
    %v1799 = vpop.f32.mrb[0].mxu0
    %1800 = vdwg.mxu0
    %1802 = vrot.lane.b32.xlu0 %v1723, 64
    %v1803 = vpop.permute.xlu0 %1802
    %v1804 = vsel %vm244, %v1803, 0
    %1806 = vmatprep.subr.mxu0 0.0
    %1807 = vmatpush1.msra.mxu0 %v233
    %1808 = vmatprep.subr.mxu0 0.0
    %1809 = vmatpush1.msra.mxu0 %v234
    %1810 = vmatprep.subr.mxu0 0.0
    %1811 = vmatpush1.msra.mxu0 0.0
    %1812 = vmatprep.subr.mxu0 0.0
    %1813 = vmatpush1.msra.mxu0 0.0
    %1814 = vmatprep.subr.mxu0 0.0
    %1815 = vmatpush1.msra.mxu0 0.0
    %1816 = vmatprep.subr.mxu0 0.0
    %1817 = vmatpush1.msra.mxu0 0.0
    %1818 = vmatprep.subr.mxu0 0.0
    %1819 = vmatpush1.msra.mxu0 0.0
    %1820 = vmatprep.subr.mxu0 0.0
    %1821 = vmatpush1.msra.mxu0 0.0
    %1822 = vmatprep.subr.mxu0 0.0
    %1823 = vmatpush1.msra.mxu0 0.0
    %1824 = vmatprep.subr.mxu0 0.0
    %1825 = vmatpush1.msra.mxu0 0.0
    %1826 = vmatprep.subr.mxu0 0.0
    %1827 = vmatpush1.msra.mxu0 0.0
    %1828 = vmatprep.subr.mxu0 0.0
    %1829 = vmatpush1.msra.mxu0 0.0
    %1830 = vmatprep.subr.mxu0 0.0
    %1831 = vmatpush1.msra.mxu0 0.0
    %1832 = vmatprep.subr.mxu0 0.0
    %1833 = vmatpush1.msra.mxu0 0.0
    %1834 = vmatprep.subr.mxu0 0.0
    %1835 = vmatpush1.msra.mxu0 0.0
    %1836 = vmatprep.subr.mxu0 0.0
    %1837 = vmatpush1.msra.mxu0 0.0
    %1838 = vmatprep.subr.mxu0 0.0
    %1839 = vmatpush1.msra.mxu0 0.0
    %1840 = vmatprep.subr.mxu0 0.0
    %1841 = vmatpush1.msra.mxu0 0.0
    %1842 = vmatprep.subr.mxu0 0.0
    %1843 = vmatpush1.msra.mxu0 0.0
    %1844 = vmatprep.subr.mxu0 0.0
    %1845 = vmatpush1.msra.mxu0 0.0
    %1846 = vmatprep.subr.mxu0 0.0
    %1847 = vmatpush1.msra.mxu0 0.0
    %1848 = vmatprep.subr.mxu0 0.0
    %1849 = vmatpush1.msra.mxu0 0.0
    %1850 = vmatprep.subr.mxu0 0.0
    %1851 = vmatpush1.msra.mxu0 0.0
    %1852 = vmatprep.subr.mxu0 0.0
    %1853 = vmatpush1.msra.mxu0 0.0
    %1854 = vmatprep.subr.mxu0 0.0
    %1855 = vmatpush1.msra.mxu0 0.0
    %1856 = vmatprep.subr.mxu0 0.0
    %1857 = vmatpush1.msra.mxu0 0.0
    %1858 = vmatprep.subr.mxu0 0.0
    %1859 = vmatpush1.msra.mxu0 0.0
    %1860 = vmatprep.subr.mxu0 0.0
    %1861 = vmatpush1.msra.mxu0 0.0
    %1862 = vmatprep.subr.mxu0 0.0
    %1863 = vmatpush1.msra.mxu0 0.0
    %1864 = vmatprep.subr.mxu0 0.0
    %1865 = vmatpush1.msra.mxu0 0.0
    %1866 = vmatprep.subr.mxu0 0.0
    %1867 = vmatpush1.msra.mxu0 0.0
    %1868 = vmatprep.subr.mxu0 0.0
    %1869 = vmatpush1.msra.mxu0 0.0
    %1870 = vmatprep.mubr.f32.mxu0 0.0
    %1871 = vmatmul.mubr.f32.gmra.mrb[0].mxu0 %v1804
    %v1872 = vpop.f32.mrb[0].mxu0
    %v1873 = vadd.f32 0.0, %v1872
    %v1874 = vpop.f32.mrb[0].mxu0
    %1875 = vdwg.mxu0
    %v1876 = vadd.f32 %v243, %v1798
    %v1877 = vxor.u32 %v1876, 2147483648
    %v1878 = vmul.f32 %v1877, 1.442695
    %v1879 = vpow.pop %v1878
    %v1880 = vadd.f32 %v1879, 1.0
    %v1881 = vrcp.pop %v1880
    %v1882 = vmul.f32 1.0, %v1881
    %v1883 = vadd.f32 %v1798, %v396
    %1885 = vrot.lane.b32.xlu0 %v1883, 96
    %v1886 = vpop.permute.xlu0 %1885
    %v1888 = vmul.f32 %v1882, %v1886
    %1890 = vrot.lane.b32.xlu0 %v1888, 32
    %v1891 = vpop.permute.xlu0 %1890
    %v1893 = vadd.f32 %v243, %v1891
    %v1894 = vtanh.pop %v1893
    %v1895 = vsub.f32 1.0, %v1882
    %1897 = vrot.lane.b32.xlu0 %v1894, 112
    %v1898 = vpop.permute.xlu0 %1897
    %v1900 = vmul.f32 %v1895, %v1898
    %v1901 = vmul.f32 %v1882, %v1692
    %v1902 = vadd.f32 %v1900, %v1901
    %1904 = vrot.lane.b32.xlu0 %v1873, 48
    %v1905 = vpop.permute.xlu0 %1904
    %v1907 = vadd.f32 %v241, %v1905
    %v1908 = vxor.u32 %v1907, 2147483648
    %v1909 = vmul.f32 %v1908, 1.442695
    %v1910 = vpow.pop %v1909
    %v1911 = vadd.f32 %v1910, 1.0
    %v1912 = vrcp.pop %v1911
    %v1913 = vmul.f32 1.0, %v1912
    %v1914 = vadd.f32 %v1873, %v430
    %1916 = vrot.lane.b32.xlu0 %v1914, 16
    %v1917 = vpop.permute.xlu0 %1916
    %v1919 = vmul.f32 %v1913, %v1917
    %1921 = vrot.lane.b32.xlu0 %v1919, 32
    %v1922 = vpop.permute.xlu0 %1921
    %v1924 = vadd.f32 %v241, %v1922
    %v1925 = vtanh.pop %v1924
    %v1926 = vsub.f32 1.0, %v1913
    %1928 = vrot.lane.b32.xlu0 %v1925, 112
    %v1929 = vpop.permute.xlu0 %1928
    %v1931 = vmul.f32 %v1926, %v1929
    %v1932 = vmul.f32 %v1913, %v1723
    %v1933 = vadd.f32 %v1931, %v1932
    %v1934 = vadd.f32 %v1724, %v1902
    %v1935 = vadd.f32 %v1725, %v1933
    %1937 = vrot.lane.b32.xlu0 %v1934, 112
    %v1938 = vpop.permute.xlu0 %1937
    %1941 = vrot.lane.b32.xlu0 %v1935, 80
    %v1942 = vpop.permute.xlu0 %1941
    %v1944 = vsel %vm244, %v1938, %v1942
    %v1945 = vmul.f32 %v1944, 0.125
    %vm1946 = vcmask 254976
    %1947 = vst.msk [vmem:[#allocation6] sm:$0x3] %vm1946, %v1945
    // Predicated region
    $region30: #{tpu_custom_call.1} parent=1 // pred_check
      _
    $region31: #{tpu_custom_call.1} parent=1 // pred_check_branch
      %1949 = sbr.rel (0) target = $region33
    $region32: #{tpu_custom_call.1} parent=1 // pred_region
      %s1951 = ssub.s32 32, 32
      %1952 = vsyncadd [#allocation5], %s1951
      %s1954 = sshll.u32 [#allocation6], 4
      %s1955 = int_to_ptr.vmem [resolvable:$true] %s1954
      %1957 = dma.vmem_to_hbm [thread:$0]  %s1955, 32, %s6, [#allocation5]
    $region33: #{tpu_custom_call.1} parent=1 // pred_fallthru
      _
    // Predicated region
    $region34: #{tpu_custom_call.1} parent=1 // pred_check
      _
    $region35: #{tpu_custom_call.1} parent=1 // pred_check_branch
      %1959 = sbr.rel (0) target = $region37
    $region36: #{tpu_custom_call.1} parent=1 // pred_region
      %1960 = dma.done [#allocation5], 32
    $region37: #{tpu_custom_call.1} parent=1 // pred_fallthru
      _
    %1961 = vsyncpa [#allocation4], 1
    %1962 = vsyncpa [#allocation5], 1

</llo_original>
